<compile_context>
chip_gen: v5e
topology: v5e:2x2
jax: 0.10.0
libtpu: 0.0.40
codegen_flags: <defaults>
</compile_context>

<pallas_src>
import functools

import jax
import jax.numpy as jnp
from jax import lax
from jax.experimental import pallas as pl
from jax.experimental.pallas import tpu as pltpu

BN_EPS = 1e-5
LANE = 128                      # feature-dim padding granularity (TPU lane width)
ROW_ALIGN = 16                  # batch-tile granularity (bf16 sublane packing = 16 rows)
W_BLOCK_BUDGET = 8 * 1024 * 1024  # target bytes for one resident weight column block


def _cdiv(a, b):
    return -(-a // b)


def _round_up(n, m):
    return _cdiv(n, m) * m


def _pad_to(a, rows, cols):
    return jnp.pad(a, ((0, rows - a.shape[0]), (0, cols - a.shape[1])))


@functools.lru_cache(maxsize=None)
def _vmem_capacity_bytes():
    """Physical per-core VMEM; fallback 64 MiB (v7x) = most conservative."""
    try:
        cap = getattr(pltpu.get_tpu_info(), "vmem_capacity_bytes", None)
        if cap:
            return int(cap)
    except Exception:
        pass
    return 64 * 1024 * 1024


@functools.lru_cache(maxsize=None)
def _buffered_supported():
    """Probe pl.Buffered(1) (single-buffering for grid-constant operands) once so we
    degrade gracefully to default double-buffering on runtimes that reject it."""
    try:
        def _k(a_ref, o_ref):
            o_ref[...] = a_ref[...] + 1.0

        f = pl.pallas_call(
            _k,
            grid=(2,),
            in_specs=[pl.BlockSpec((8, LANE), lambda i: (0, 0),
                                   pipeline_mode=pl.Buffered(1))],
            out_specs=pl.BlockSpec((8, LANE), lambda i: (i, 0)),
            out_shape=jax.ShapeDtypeStruct((16, LANE), jnp.float32),
        )
        res = jax.block_until_ready(f(jnp.zeros((8, LANE), jnp.float32)))
        return bool(jnp.all(res == 1.0))
    except Exception:
        return False


# --------------------------------------------------------------------------- #
# Kernel: one Linear layer, with an optional fused BN(scale/shift)+ReLU prologue
# (scale/shift reduced in-kernel from the previous layer's per-tile partial sums),
# an optional bias, and optional masked partial BN statistics for the *next* BN.
# --------------------------------------------------------------------------- #
def _layer_kernel(tile_b, valid_rows, inv_n, b_axis,
                  has_bn_in, with_stats, has_bias, *refs):
    it = iter(refs)
    h_ref = next(it)
    if has_bn_in:
        stats_ref = next(it)
        gamma_ref = next(it)
        beta_ref = next(it)
    w_ref = next(it)
    b_ref = next(it) if has_bias else None
    z_ref = next(it)
    so_ref = next(it) if with_stats else None

    h = h_ref[...].astype(jnp.float32)

    if has_bn_in:
        # Reduce the previous layer's per-tile partial sums into the fused BN
        # scale/shift.  Recomputed every grid step (a few KiB of VPU/XLU/EUP work,
        # hidden under the activation DMAs); a pl.when(step==0)-into-scratch variant
        # would break under megacore sharding where each TC sees only part of the grid.
        # Note: E[z^2]-mean^2 in f32, clamped >= 0 (single-pass; adequate for typical
        # GIN batch sizes, matches the kernel-mirroring reference below).
        tot = jnp.sum(stats_ref[...], axis=0)                       # (2, d_in) f32
        mean = tot[0:1, :] * inv_n
        var = jnp.maximum(tot[1:2, :] * inv_n - mean * mean, 0.0)   # biased (train mode)
        scale = gamma_ref[...] * lax.rsqrt(var + BN_EPS)
        shift = beta_ref[...] - mean * scale
        h = jnp.maximum(h * scale + shift, 0.0)

    # MXU matmul: bf16 operands, f32 accumulation.
    z = jnp.dot(h.astype(jnp.bfloat16), w_ref[...],
                preferred_element_type=jnp.float32)
    if has_bias:
        z = z + b_ref[...]
    z_ref[...] = z.astype(z_ref.dtype)

    if with_stats:
        # Partial sum / sum-of-squares for the next BatchNorm's batch statistics,
        # taken from the in-register f32 z (not the bf16-rounded store).  The padded-row
        # mask is applied only on tiles that actually contain padding.
        i = pl.program_id(b_axis)
        needs_mask = (i + 1) * tile_b > valid_rows

        def _store(zz):
            so_ref[...] = jnp.concatenate(
                [jnp.sum(zz, axis=0, keepdims=True),
                 jnp.sum(zz * zz, axis=0, keepdims=True)], axis=0)[None]

        @pl.when(needs_mask)
        def _():
            row = (lax.broadcasted_iota(jnp.int32, (tile_b, 1), 0) + i * tile_b)
            _store(jnp.where(row < valid_rows, z, 0.0))

        @pl.when(jnp.logical_not(needs_mask))
        def _():
            _store(z)


def _layer_call(h, w, *, bn=None, bias=None, out_dtype,
                valid_rows, tile_b, tile_n, with_stats, use_buffered):
    """One batch/column-tiled pallas_call for a single Linear layer."""
    bpad, d_in = h.shape
    d_out = w.shape[1]
    n_b = bpad // tile_b
    n_n = d_out // tile_n
    has_bn_in = bn is not None
    has_bias = bias is not None

    def resident(block_shape, index_map):
        # Grid-(near-)constant operands: single-buffer when supported -- the default
        # 2-deep pipelining doubles their VMEM footprint for zero benefit.
        if use_buffered:
            return pl.BlockSpec(block_shape, index_map, pipeline_mode=pl.Buffered(1))
        return pl.BlockSpec(block_shape, index_map)

    if n_n == 1:
        # 1-D grid over batch tiles: the single parallel axis is the batch, so the
        # v7x megacore always has >= 2 steps to shard (see tiling selection below).
        grid = (n_b,)
        dimsem = ("parallel",)
        b_axis = 0
        act_map = lambda i: (i, 0)
        vec_map = lambda i: (0, 0)
        st_in_map = lambda i: (0, 0, 0)
        w_map = lambda i: (0, 0)
        out_map = lambda i: (i, 0)
        st_out_map = lambda i: (i, 0, 0)
    else:
        # Column (N) tiling for weights too large to sit whole in VMEM (v7x: 64 MiB).
        # N is the *outer* axis so each weight column block is DMA'd once while the
        # batch tiles stream under it.
        grid = (n_n, n_b)
        dimsem = ("parallel", "parallel")
        b_axis = 1
        act_map = lambda j, i: (i, 0)
        vec_map = lambda j, i: (0, 0)
        st_in_map = lambda j, i: (0, 0, 0)
        w_map = lambda j, i: (0, j)
        out_map = lambda j, i: (i, j)
        st_out_map = lambda j, i: (i, 0, j)

    inv_n = 1.0 / float(valid_rows)
    kernel = functools.partial(_layer_kernel, tile_b, valid_rows, inv_n, b_axis,
                               has_bn_in, with_stats, has_bias)

    nbuf_const = 1 if use_buffered else 2
    inputs = [h]
    in_specs = [pl.BlockSpec((tile_b, d_in), act_map)]             # streamed tiles
    need = 2 * tile_b * d_in * h.dtype.itemsize
    if has_bn_in:
        stats, gamma, beta = bn
        inputs += [stats, gamma, beta]
        in_specs += [resident(stats.shape, st_in_map),             # VMEM-resident
                     resident((1, d_in), vec_map),
                     resident((1, d_in), vec_map)]
        need += nbuf_const * (stats.size * 4 + 2 * d_in * 4)
    inputs.append(w)
    in_specs.append(resident((d_in, tile_n), w_map))               # VMEM-resident
    need += nbuf_const * d_in * tile_n * w.dtype.itemsize
    if has_bias:
        inputs.append(bias)
        in_specs.append(resident((1, tile_n), w_map))              # VMEM-resident
        need += nbuf_const * tile_n * 4

    out_shapes = [jax.ShapeDtypeStruct((bpad, d_out), out_dtype)]
    out_specs = [pl.BlockSpec((tile_b, tile_n), out_map)]
    need += 2 * tile_b * tile_n * jnp.dtype(out_dtype).itemsize
    if with_stats:
        out_shapes.append(jax.ShapeDtypeStruct((n_b, 2, d_out), jnp.float32))
        out_specs.append(pl.BlockSpec((1, 2, tile_n), st_out_map))
        need += 2 * 2 * tile_n * 4

    # Derived scoped-VMEM limit: actual footprint + headroom, clamped safely below the
    # physical VMEM of this generation (never "all of VMEM", which a hard-coded 64 MiB
    # would be on v7x).
    cap = _vmem_capacity_bytes()
    vmem_limit = int(need * 1.4) + (2 << 20)
    vmem_limit = max(16 << 20, min(vmem_limit, cap - (12 << 20)))

    outs = pl.pallas_call(
        kernel,
        grid=grid,
        in_specs=in_specs,
        out_specs=out_specs,
        out_shape=out_shapes,
        compiler_params=pltpu.CompilerParams(
            dimension_semantics=dimsem,
            vmem_limit_bytes=vmem_limit,
        ),
    )(*inputs)

    if with_stats:
        return outs[0], outs[1]
    return outs[0], None


# --------------------------------------------------------------------------- #
# Tiling selection.
# --------------------------------------------------------------------------- #
def _pick_tile_n(d_in, d_out):
    """Largest 128-multiple column tile whose bf16 weight block fits the VMEM budget."""
    if d_in * d_out * 2 <= W_BLOCK_BUDGET:
        return d_out
    tn = max(LANE, (W_BLOCK_BUDGET // (d_in * 2)) // LANE * LANE)
    while d_out % tn:           # d_out is a multiple of 128, so tn=128 always terminates
        tn -= LANE
    return max(tn, LANE)


def _pick_batch_tiling(batch, d_max, tile_b=None):
    if tile_b is not None:
        tile_b = max(ROW_ALIGN, _round_up(int(tile_b), ROW_ALIGN))
        n_b = max(1, _cdiv(batch, tile_b))
    else:
        # Bigger tiles amortize the ~0.35us/grid-step pipeline overhead (v5e cares most),
        # but keep >= 2 grid steps so both v7x TensorCores get work, and pad the batch by
        # at most ROW_ALIGN-1 rows per tile instead of rounding up to a fixed 512.
        target = 2048 if d_max <= 256 else (1024 if d_max <= 1024 else 512)
        n_b = max(2, _cdiv(batch, target))
        tile_b = _round_up(_cdiv(batch, n_b), ROW_ALIGN)
    return tile_b, n_b, n_b * tile_b


# --------------------------------------------------------------------------- #
# Forward pass.
# --------------------------------------------------------------------------- #
@functools.partial(jax.jit, static_argnames=("num_layers", "output_dim", "tile_b",
                                             "tile_n", "use_buffered"))
def _mlp_forward_impl(x, kparams, *, num_layers, output_dim, tile_b, tile_n,
                      use_buffered):
    batch, d_in = x.shape
    ws = kparams["w"]
    d_in_pad = ws[0].shape[0]
    d_max = max(max(w.shape[0], w.shape[1]) for w in ws)

    tile_b, n_b, bpad = _pick_batch_tiling(batch, d_max, tile_b)

    def pick_tn(w):
        if tile_n is not None and w.shape[1] % tile_n == 0:
            return tile_n
        return _pick_tile_n(w.shape[0], w.shape[1])

    # Pad batch to the tile grid and features to the lane-padded width; store bf16
    # (matmul operands are bf16 anyway, so this just halves the first layer's DMA).
    xp = jnp.zeros((bpad, d_in_pad), jnp.bfloat16)
    xp = xp.at[:batch, :d_in].set(x.astype(jnp.bfloat16))

    h = xp
    bn = None
    for layer in range(num_layers - 1):
        w = ws[layer]
        z, stats = _layer_call(
            h, w, bn=bn, bias=None, out_dtype=jnp.bfloat16,      # bf16 activation store
            valid_rows=batch, tile_b=tile_b, tile_n=pick_tn(w),
            with_stats=True, use_buffered=use_buffered)
        bn = (stats, kparams["gamma"][layer], kparams["beta"][layer])
        h = z
    w = ws[-1]
    y, _ = _layer_call(
        h, w, bn=bn, bias=kparams["bias"], out_dtype=jnp.float32,
        valid_rows=batch, tile_b=tile_b, tile_n=pick_tn(w),
        with_stats=False, use_buffered=use_buffered)
    return y[:batch, :output_dim]


def mlp_forward(x, kparams, *, num_layers, output_dim, tile_b=None, tile_n=None):
    return _mlp_forward_impl(x, kparams, num_layers=num_layers, output_dim=output_dim,
                             tile_b=tile_b, tile_n=tile_n,
                             use_buffered=_buffered_supported())


# --------------------------------------------------------------------------- #
# Parameter construction (matches the PyTorch module's shapes / init style).
# --------------------------------------------------------------------------- #
def init_mlp_params(key, num_layers, input_dim, hidden_dim, output_dim):
    """f32 master params. Flat list:
       num_layers == 1 : [W0^T, b0]
       num_layers  > 1 : [W^T, b, gamma, beta] * (num_layers-1) + [W_last^T, b_last]
       Weights stored pre-transposed as [in, out]; vectors as [1, out]."""
    if num_layers < 1:
        raise ValueError("number of layers should be positive!")

    def linear(k, d_in, d_out):
        kw, kb = jax.random.split(k)
        bound = 1.0 / jnp.sqrt(d_in)
        w = jax.random.uniform(kw, (d_in, d_out), jnp.float32, -bound, bound)
        b = jax.random.uniform(kb, (1, d_out), jnp.float32, -bound, bound)
        return w, b

    params = []
    if num_layers == 1:
        w, b = linear(key, input_dim, output_dim)
        return [w, b]

    dims = [input_dim] + [hidden_dim] * (num_layers - 1) + [output_dim]
    keys = jax.random.split(key, num_layers)
    for layer in range(num_layers - 1):
        w, b = linear(keys[layer], dims[layer], dims[layer + 1])
        params += [w, b,
                   jnp.ones((1, dims[layer + 1]), jnp.float32),
                   jnp.zeros((1, dims[layer + 1]), jnp.float32)]
    w, b = linear(keys[-1], dims[-2], dims[-1])
    params += [w, b]
    return params


def prepare_kernel_params(params, num_layers):
    """Pad feature dims to multiples of 128, cast weights to bf16, drop hidden
    biases (they cancel exactly under the BN mean subtraction)."""
    _buffered_supported()   # warm the capability probe outside any jit trace

    def pad_dims(w):
        return _round_up(w.shape[0], LANE), _round_up(w.shape[1], LANE)

    if num_layers == 1:
        w, b = params
        r, c = pad_dims(w)
        return {"w": [_pad_to(w, r, c).astype(jnp.bfloat16)],
                "gamma": [], "beta": [],
                "bias": _pad_to(b, 1, c).astype(jnp.float32)}

    ws, gammas, betas = [], [], []
    idx = 0
    for _ in range(num_layers - 1):
        w, _b, g, beta = params[idx:idx + 4]
        idx += 4
        r, c = pad_dims(w)
        ws.append(_pad_to(w, r, c).astype(jnp.bfloat16))
        gammas.append(_pad_to(g, 1, c).astype(jnp.float32))
        betas.append(_pad_to(beta, 1, c).astype(jnp.float32))
    w, b = params[idx], params[idx + 1]
    r, c = pad_dims(w)
    ws.append(_pad_to(w, r, c).astype(jnp.bfloat16))
    return {"w": ws, "gamma": gammas, "beta": betas,
            "bias": _pad_to(b, 1, c).astype(jnp.float32)}


# --------------------------------------------------------------------------- #
# Pure-JAX references.
#   mixed=False : exact PyTorch training-mode semantics, all f32.
#   mixed=True  : mirrors the kernel's precision (bf16 matmul operands, bf16 inter-layer
#                 activation storage, f32 accumulation / BN math, hidden biases dropped,
#                 single-pass variance).
# --------------------------------------------------------------------------- #
def mlp_reference(x, params, num_layers, *, mixed=False):
    mm_dt = jnp.bfloat16 if mixed else jnp.float32
    h = x.astype(mm_dt)
    idx = 0
    for _ in range(num_layers - 1):
        w, b, g, beta = params[idx:idx + 4]
        idx += 4
        z = jnp.dot(h.astype(mm_dt), w.astype(mm_dt),
                    preferred_element_type=jnp.float32)
        if mixed:
            mean = jnp.mean(z, axis=0, keepdims=True)
            var = jnp.maximum(jnp.mean(z * z, axis=0, keepdims=True) - mean * mean, 0.0)
            scale = g * lax.rsqrt(var + BN_EPS)
            shift = beta - mean * scale
            zs = z.astype(jnp.bfloat16).astype(jnp.float32)   # bf16 activation round-trip
            h = jnp.maximum(zs * scale + shift, 0.0)
        else:
            z = z + b
            mean = jnp.mean(z, axis=0, keepdims=True)
            var = jnp.mean((z - mean) ** 2, axis=0, keepdims=True)
            h = jnp.maximum(g * (z - mean) * lax.rsqrt(var + BN_EPS) + beta, 0.0)
    w, b = params[idx], params[idx + 1]
    return jnp.dot(h.astype(mm_dt), w.astype(mm_dt),
                   preferred_element_type=jnp.float32) + b


if __name__ == "__main__":
    num_layers = 3
    batch, input_dim, hidden_dim, output_dim = 20, 16, 32, 8
    tile_b = 16   # small tile: exercises the multi-tile batch grid + tail-row masking

    key = jax.random.PRNGKey(0)
    kx, kp = jax.random.split(key)
    x = jax.random.normal(kx, (batch, input_dim), jnp.float32)

    params = init_mlp_params(kp, num_layers, input_dim, hidden_dim, output_dim)
    kparams = prepare_kernel_params(params, num_layers)

    out = jax.block_until_ready(
        mlp_forward(x, kparams, num_layers=num_layers, output_dim=output_dim,
                    tile_b=tile_b))
    assert out.shape == (batch, output_dim)

    # Tight check vs a reference that mirrors the kernel's precision exactly.
    ref_mixed = mlp_reference(x, params, num_layers, mixed=True)
    assert jnp.allclose(out, ref_mixed, atol=2e-2, rtol=2e-2), \
        "mismatch vs mixed-precision reference"

    # Sanity check vs the pure-f32 PyTorch-semantics reference (bf16 noise only).
    ref_f32 = mlp_reference(x, params, num_layers, mixed=False)
    assert jnp.allclose(out, ref_f32, atol=0.2, rtol=0.2), "mismatch vs f32 reference"

    # num_layers == 1 (pure linear) branch + automatic batch tiling.
    p1 = init_mlp_params(kp, 1, input_dim, hidden_dim, output_dim)
    k1 = prepare_kernel_params(p1, 1)
    out1 = jax.block_until_ready(
        mlp_forward(x, k1, num_layers=1, output_dim=output_dim))
    ref1 = mlp_reference(x, p1, 1, mixed=True)
    assert out1.shape == (batch, output_dim)
    assert jnp.allclose(out1, ref1, atol=2e-2, rtol=2e-2), "mismatch (linear branch)"

    # Column-tiled (2-D grid) path: force 128-wide output-feature tiles on a wider MLP
    # (the path used on v7x when the resident weight would blow its 64 MiB VMEM).
    p2 = init_mlp_params(kp, 2, input_dim, 256, output_dim)
    k2 = prepare_kernel_params(p2, 2)
    out2 = jax.block_until_ready(
        mlp_forward(x, k2, num_layers=2, output_dim=output_dim, tile_n=128))
    ref2 = mlp_reference(x, p2, 2, mixed=True)
    assert out2.shape == (batch, output_dim)
    assert jnp.allclose(out2, ref2, atol=2e-2, rtol=2e-2), "mismatch (column-tiled path)"

    print("KERNEL_OK")
</pallas_src>

<mosaic_0001>
module attributes {stable_mosaic.version = 11 : i64} {
  func.func @_k(%arg0: i32, %arg1: memref<8x128xf32, #tpu.memory_space<vmem>>, %arg2: memref<8x128xf32, #tpu.memory_space<vmem>>) attributes {dimension_semantics = [#tpu.dimension_semantics<arbitrary>], iteration_bounds = array<i64: 2>, scalar_prefetch = 0 : i64, scratch_operands = 0 : i64, tpu.core_type = #tpu.core_type<tc>, window_params = [{pipeline_mode = #tpu.pipeline_mode<synchronous>, transform_indices = @transform_0, window_bounds = array<i64: 8, 128>}, {transform_indices = @transform_1, window_bounds = array<i64: 8, 128>}]} {
    %c0 = arith.constant 0 : index
    %c0_0 = arith.constant 0 : index
    %0 = vector.load %arg1[%c0, %c0_0] : memref<8x128xf32, #tpu.memory_space<vmem>>, vector<8x128xf32>
    %cst = arith.constant 1.000000e+00 : f32
    %1 = vector.broadcast %cst : f32 to vector<8x128xf32>
    %2 = arith.addf %0, %1 : vector<8x128xf32>
    %c0_1 = arith.constant 0 : index
    %c0_2 = arith.constant 0 : index
    %3 = vector.load %arg2[%c0_1, %c0_2] : memref<8x128xf32, #tpu.memory_space<vmem>>, vector<8x128xf32>
    tpu.vector_store %arg2[%c0_1, %c0_2], %2 {strides = array<i32>} : memref<8x128xf32, #tpu.memory_space<vmem>>, vector<8x128xf32>,
    return
  }
  func.func @transform_0(%arg0: i32) -> (i32, i32) {
    %c0_i32 = arith.constant 0 : i32
    %c0_i32_0 = arith.constant 0 : i32
    %c0_i32_1 = arith.constant 0 : i32
    return %c0_i32, %c0_i32_0 : i32, i32
  }
  func.func @transform_1(%arg0: i32) -> (i32, i32) {
    %c0_i32 = arith.constant 0 : i32
    %c0_i32_0 = arith.constant 0 : i32
    return %arg0, %c0_i32 : i32, i32
  }
}

module attributes {stable_mosaic.version = 11 : i64} {
  func.func @_layer_kernel(%arg0: i32, %arg1: memref<16x128xbf16, #tpu.memory_space<vmem>>, %arg2: memref<128x128xbf16, #tpu.memory_space<vmem>>, %arg3: memref<16x128xbf16, #tpu.memory_space<vmem>>, %arg4: memref<1x2x128xf32, #tpu.memory_space<vmem>>) attributes {dimension_semantics = [#tpu.dimension_semantics<parallel>], iteration_bounds = array<i64: 2>, scalar_prefetch = 0 : i64, scratch_operands = 0 : i64, tpu.core_type = #tpu.core_type<tc>, window_params = [{transform_indices = @transform_0, window_bounds = array<i64: 16, 128>}, {pipeline_mode = #tpu.pipeline_mode<synchronous>, transform_indices = @transform_1, window_bounds = array<i64: 128, 128>}, {transform_indices = @transform_2, window_bounds = array<i64: 16, 128>}, {transform_indices = @transform_3, window_bounds = array<i64: 1, 2, 128>}]} {
    %c0 = arith.constant 0 : index
    %c0_0 = arith.constant 0 : index
    %0 = vector.load %arg1[%c0, %c0_0] : memref<16x128xbf16, #tpu.memory_space<vmem>>, vector<16x128xbf16>
    %1 = arith.extf %0 : vector<16x128xbf16> to vector<16x128xf32>
    %2 = arith.truncf %1 : vector<16x128xf32> to vector<16x128xbf16>
    %c0_1 = arith.constant 0 : index
    %c0_2 = arith.constant 0 : index
    %3 = vector.load %arg2[%c0_1, %c0_2] : memref<128x128xbf16, #tpu.memory_space<vmem>>, vector<128x128xbf16>
    %cst = arith.constant dense<0.000000e+00> : vector<16x128xf32>
    %4 = tpu.matmul %2, %3, %cst {dimension_numbers = #tpu.dot_dimension_numbers<[1], [0], [0], [1], [0, 0, 1, 1], [], []>} : vector<16x128xbf16>, vector<128x128xbf16>, vector<16x128xf32> -> vector<16x128xf32>
    %5 = arith.truncf %4 : vector<16x128xf32> to vector<16x128xbf16>
    %c0_3 = arith.constant 0 : index
    %c0_4 = arith.constant 0 : index
    %6 = vector.load %arg3[%c0_3, %c0_4] : memref<16x128xbf16, #tpu.memory_space<vmem>>, vector<16x128xbf16>
    tpu.vector_store %arg3[%c0_3, %c0_4], %5 {strides = array<i32>} : memref<16x128xbf16, #tpu.memory_space<vmem>>, vector<16x128xbf16>,
    %c1_i32 = arith.constant 1 : i32
    %7 = arith.addi %arg0, %c1_i32 : i32
    %c16_i32 = arith.constant 16 : i32
    %8 = arith.muli %7, %c16_i32 : i32
    %c20_i32 = arith.constant 20 : i32
    %9 = arith.cmpi sgt, %8, %c20_i32 : i32
    %10 = arith.extui %9 : i1 to i32
    %c0_i32 = arith.constant 0 : i32
    %11 = arith.cmpi ne, %10, %c0_i32 : i32
    scf.if %11 {
      %15 = tpu.iota {dimensions = array<i32: 0>} : vector<16x1xi32>
      %c16_i32_6 = arith.constant 16 : i32
      %16 = arith.muli %arg0, %c16_i32_6 : i32
      %17 = vector.broadcast %16 : i32 to vector<16x1xi32>
      %18 = arith.addi %15, %17 : vector<16x1xi32>
      %c20_i32_7 = arith.constant 20 : i32
      %19 = vector.broadcast %c20_i32_7 : i32 to vector<16x1xi32>
      %20 = arith.cmpi slt, %18, %19 : vector<16x1xi32>
      %cst_8 = arith.constant 0.000000e+00 : f32
      %21 = vector.shape_cast %20 : vector<16x1xi1> to vector<16x1xi1>
      %22 = vector.broadcast %21 : vector<16x1xi1> to vector<16x128xi1>
      %23 = vector.broadcast %cst_8 : f32 to vector<16x128xf32>
      %24 = arith.select %22, %4, %23 : vector<16x128xi1>, vector<16x128xf32>
      %cst_9 = arith.constant dense<0.000000e+00> : vector<128xf32>
      %25 = vector.multi_reduction <add>, %24, %cst_9 [0] : vector<16x128xf32> to vector<128xf32>
      %26 = vector.shape_cast %25 : vector<128xf32> to vector<1x128xf32>
      %27 = arith.mulf %24, %24 : vector<16x128xf32>
      %cst_10 = arith.constant dense<0.000000e+00> : vector<128xf32>
      %28 = vector.multi_reduction <add>, %27, %cst_10 [0] : vector<16x128xf32> to vector<128xf32>
      %29 = vector.shape_cast %28 : vector<128xf32> to vector<1x128xf32>
      %30 = tpu.concatenate %26, %29 in 0 : vector<1x128xf32>, vector<1x128xf32> -> vector<2x128xf32>
      %31 = vector.shape_cast %30 : vector<2x128xf32> to vector<1x2x128xf32>
      %c0_11 = arith.constant 0 : index
      %c0_12 = arith.constant 0 : index
      %c0_13 = arith.constant 0 : index
      %32 = vector.load %arg4[%c0_11, %c0_12, %c0_13] : memref<1x2x128xf32, #tpu.memory_space<vmem>>, vector<1x2x128xf32>
      tpu.vector_store %arg4[%c0_11, %c0_12, %c0_13], %31 {strides = array<i32>} : memref<1x2x128xf32, #tpu.memory_space<vmem>>, vector<1x2x128xf32>,
    } else {
    }
    %true = arith.constant true
    %12 = arith.xori %9, %true : i1
    %13 = arith.extui %12 : i1 to i32
    %c0_i32_5 = arith.constant 0 : i32
    %14 = arith.cmpi ne, %13, %c0_i32_5 : i32
    scf.if %14 {
      %cst_6 = arith.constant dense<0.000000e+00> : vector<128xf32>
      %15 = vector.multi_reduction <add>, %4, %cst_6 [0] : vector<16x128xf32> to vector<128xf32>
      %16 = vector.shape_cast %15 : vector<128xf32> to vector<1x128xf32>
      %17 = arith.mulf %4, %4 : vector<16x128xf32>
      %cst_7 = arith.constant dense<0.000000e+00> : vector<128xf32>
      %18 = vector.multi_reduction <add>, %17, %cst_7 [0] : vector<16x128xf32> to vector<128xf32>
      %19 = vector.shape_cast %18 : vector<128xf32> to vector<1x128xf32>
      %20 = tpu.concatenate %16, %19 in 0 : vector<1x128xf32>, vector<1x128xf32> -> vector<2x128xf32>
      %21 = vector.shape_cast %20 : vector<2x128xf32> to vector<1x2x128xf32>
      %c0_8 = arith.constant 0 : index
      %c0_9 = arith.constant 0 : index
      %c0_10 = arith.constant 0 : index
      %22 = vector.load %arg4[%c0_8, %c0_9, %c0_10] : memref<1x2x128xf32, #tpu.memory_space<vmem>>, vector<1x2x128xf32>
      tpu.vector_store %arg4[%c0_8, %c0_9, %c0_10], %21 {strides = array<i32>} : memref<1x2x128xf32, #tpu.memory_space<vmem>>, vector<1x2x128xf32>,
    } else {
    }
    return
  }
  func.func @transform_0(%arg0: i32) -> (i32, i32) {
    %c0_i32 = arith.constant 0 : i32
    %c0_i32_0 = arith.constant 0 : i32
    return %arg0, %c0_i32 : i32, i32
  }
  func.func @transform_1(%arg0: i32) -> (i32, i32) {
    %c0_i32 = arith.constant 0 : i32
    %c0_i32_0 = arith.constant 0 : i32
    %c0_i32_1 = arith.constant 0 : i32
    return %c0_i32, %c0_i32_0 : i32, i32
  }
  func.func @transform_2(%arg0: i32) -> (i32, i32) {
    %c0_i32 = arith.constant 0 : i32
    %c0_i32_0 = arith.constant 0 : i32
    return %arg0, %c0_i32 : i32, i32
  }
  func.func @transform_3(%arg0: i32) -> (i32, i32, i32) {
    %c0_i32 = arith.constant 0 : i32
    %c0_i32_0 = arith.constant 0 : i32
    %c0_i32_1 = arith.constant 0 : i32
    return %arg0, %c0_i32, %c0_i32_0 : i32, i32, i32
  }
}

module attributes {stable_mosaic.version = 11 : i64} {
  func.func @_layer_kernel(%arg0: i32, %arg1: memref<16x128xbf16, #tpu.memory_space<vmem>>, %arg2: memref<2x2x128xf32, #tpu.memory_space<vmem>>, %arg3: memref<1x128xf32, #tpu.memory_space<vmem>>, %arg4: memref<1x128xf32, #tpu.memory_space<vmem>>, %arg5: memref<128x128xbf16, #tpu.memory_space<vmem>>, %arg6: memref<16x128xbf16, #tpu.memory_space<vmem>>, %arg7: memref<1x2x128xf32, #tpu.memory_space<vmem>>) attributes {dimension_semantics = [#tpu.dimension_semantics<parallel>], iteration_bounds = array<i64: 2>, scalar_prefetch = 0 : i64, scratch_operands = 0 : i64, tpu.core_type = #tpu.core_type<tc>, window_params = [{transform_indices = @transform_0, window_bounds = array<i64: 16, 128>}, {pipeline_mode = #tpu.pipeline_mode<synchronous>, transform_indices = @transform_1, window_bounds = array<i64: 2, 2, 128>}, {pipeline_mode = #tpu.pipeline_mode<synchronous>, transform_indices = @transform_2, window_bounds = array<i64: 1, 128>}, {pipeline_mode = #tpu.pipeline_mode<synchronous>, transform_indices = @transform_3, window_bounds = array<i64: 1, 128>}, {pipeline_mode = #tpu.pipeline_mode<synchronous>, transform_indices = @transform_4, window_bounds = array<i64: 128, 128>}, {transform_indices = @transform_5, window_bounds = array<i64: 16, 128>}, {transform_indices = @transform_6, window_bounds = array<i64: 1, 2, 128>}]} {
    %c0 = arith.constant 0 : index
    %c0_0 = arith.constant 0 : index
    %0 = vector.load %arg1[%c0, %c0_0] : memref<16x128xbf16, #tpu.memory_space<vmem>>, vector<16x128xbf16>
    %1 = arith.extf %0 : vector<16x128xbf16> to vector<16x128xf32>
    %c0_1 = arith.constant 0 : index
    %c0_2 = arith.constant 0 : index
    %c0_3 = arith.constant 0 : index
    %2 = vector.load %arg2[%c0_1, %c0_2, %c0_3] : memref<2x2x128xf32, #tpu.memory_space<vmem>>, vector<2x2x128xf32>
    %cst = arith.constant dense<0.000000e+00> : vector<2x128xf32>
    %3 = vector.multi_reduction <add>, %2, %cst [0] : vector<2x2x128xf32> to vector<2x128xf32>
    %4 = vector.extract_strided_slice %3 {offsets = [0, 0], sizes = [1, 128], strides = [1, 1]} : vector<2x128xf32> to vector<1x128xf32>
    %cst_4 = arith.constant 5.000000e-02 : f32
    %5 = vector.broadcast %cst_4 : f32 to vector<1x128xf32>
    %6 = arith.mulf %4, %5 : vector<1x128xf32>
    %7 = vector.extract_strided_slice %3 {offsets = [1, 0], sizes = [1, 128], strides = [1, 1]} : vector<2x128xf32> to vector<1x128xf32>
    %cst_5 = arith.constant 5.000000e-02 : f32
    %8 = vector.broadcast %cst_5 : f32 to vector<1x128xf32>
    %9 = arith.mulf %7, %8 : vector<1x128xf32>
    %10 = arith.mulf %6, %6 : vector<1x128xf32>
    %11 = arith.subf %9, %10 : vector<1x128xf32>
    %cst_6 = arith.constant 0.000000e+00 : f32
    %12 = vector.broadcast %cst_6 : f32 to vector<1x128xf32>
    %13 = arith.maximumf %11, %12 : vector<1x128xf32>
    %c0_7 = arith.constant 0 : index
    %c0_8 = arith.constant 0 : index
    %14 = vector.load %arg3[%c0_7, %c0_8] : memref<1x128xf32, #tpu.memory_space<vmem>>, vector<1x128xf32>
    %cst_9 = arith.constant 9.99999974E-6 : f32
    %15 = vector.broadcast %cst_9 : f32 to vector<1x128xf32>
    %16 = arith.addf %13, %15 : vector<1x128xf32>
    %17 = math.rsqrt %16 : vector<1x128xf32>
    %18 = arith.mulf %14, %17 : vector<1x128xf32>
    %c0_10 = arith.constant 0 : index
    %c0_11 = arith.constant 0 : index
    %19 = vector.load %arg4[%c0_10, %c0_11] : memref<1x128xf32, #tpu.memory_space<vmem>>, vector<1x128xf32>
    %20 = arith.mulf %6, %18 : vector<1x128xf32>
    %21 = arith.subf %19, %20 : vector<1x128xf32>
    %22 = vector.broadcast %18 : vector<1x128xf32> to vector<16x128xf32>
    %23 = arith.mulf %1, %22 : vector<16x128xf32>
    %24 = vector.broadcast %21 : vector<1x128xf32> to vector<16x128xf32>
    %25 = arith.addf %23, %24 : vector<16x128xf32>
    %cst_12 = arith.constant 0.000000e+00 : f32
    %26 = vector.broadcast %cst_12 : f32 to vector<16x128xf32>
    %27 = arith.maximumf %25, %26 : vector<16x128xf32>
    %28 = arith.truncf %27 : vector<16x128xf32> to vector<16x128xbf16>
    %c0_13 = arith.constant 0 : index
    %c0_14 = arith.constant 0 : index
    %29 = vector.load %arg5[%c0_13, %c0_14] : memref<128x128xbf16, #tpu.memory_space<vmem>>, vector<128x128xbf16>
    %cst_15 = arith.constant dense<0.000000e+00> : vector<16x128xf32>
    %30 = tpu.matmul %28, %29, %cst_15 {dimension_numbers = #tpu.dot_dimension_numbers<[1], [0], [0], [1], [0, 0, 1, 1], [], []>} : vector<16x128xbf16>, vector<128x128xbf16>, vector<16x128xf32> -> vector<16x128xf32>
    %31 = arith.truncf %30 : vector<16x128xf32> to vector<16x128xbf16>
    %c0_16 = arith.constant 0 : index
    %c0_17 = arith.constant 0 : index
    %32 = vector.load %arg6[%c0_16, %c0_17] : memref<16x128xbf16, #tpu.memory_space<vmem>>, vector<16x128xbf16>
    tpu.vector_store %arg6[%c0_16, %c0_17], %31 {strides = array<i32>} : memref<16x128xbf16, #tpu.memory_space<vmem>>, vector<16x128xbf16>,
    %c1_i32 = arith.constant 1 : i32
    %33 = arith.addi %arg0, %c1_i32 : i32
    %c16_i32 = arith.constant 16 : i32
    %34 = arith.muli %33, %c16_i32 : i32
    %c20_i32 = arith.constant 20 : i32
    %35 = arith.cmpi sgt, %34, %c20_i32 : i32
    %36 = arith.extui %35 : i1 to i32
    %c0_i32 = arith.constant 0 : i32
    %37 = arith.cmpi ne, %36, %c0_i32 : i32
    scf.if %37 {
      %41 = tpu.iota {dimensions = array<i32: 0>} : vector<16x1xi32>
      %c16_i32_19 = arith.constant 16 : i32
      %42 = arith.muli %arg0, %c16_i32_19 : i32
      %43 = vector.broadcast %42 : i32 to vector<16x1xi32>
      %44 = arith.addi %41, %43 : vector<16x1xi32>
      %c20_i32_20 = arith.constant 20 : i32
      %45 = vector.broadcast %c20_i32_20 : i32 to vector<16x1xi32>
      %46 = arith.cmpi slt, %44, %45 : vector<16x1xi32>
      %cst_21 = arith.constant 0.000000e+00 : f32
      %47 = vector.shape_cast %46 : vector<16x1xi1> to vector<16x1xi1>
      %48 = vector.broadcast %47 : vector<16x1xi1> to vector<16x128xi1>
      %49 = vector.broadcast %cst_21 : f32 to vector<16x128xf32>
      %50 = arith.select %48, %30, %49 : vector<16x128xi1>, vector<16x128xf32>
      %cst_22 = arith.constant dense<0.000000e+00> : vector<128xf32>
      %51 = vector.multi_reduction <add>, %50, %cst_22 [0] : vector<16x128xf32> to vector<128xf32>
      %52 = vector.shape_cast %51 : vector<128xf32> to vector<1x128xf32>
      %53 = arith.mulf %50, %50 : vector<16x128xf32>
      %cst_23 = arith.constant dense<0.000000e+00> : vector<128xf32>
      %54 = vector.multi_reduction <add>, %53, %cst_23 [0] : vector<16x128xf32> to vector<128xf32>
      %55 = vector.shape_cast %54 : vector<128xf32> to vector<1x128xf32>
      %56 = tpu.concatenate %52, %55 in 0 : vector<1x128xf32>, vector<1x128xf32> -> vector<2x128xf32>
      %57 = vector.shape_cast %56 : vector<2x128xf32> to vector<1x2x128xf32>
      %c0_24 = arith.constant 0 : index
      %c0_25 = arith.constant 0 : index
      %c0_26 = arith.constant 0 : index
      %58 = vector.load %arg7[%c0_24, %c0_25, %c0_26] : memref<1x2x128xf32, #tpu.memory_space<vmem>>, vector<1x2x128xf32>
      tpu.vector_store %arg7[%c0_24, %c0_25, %c0_26], %57 {strides = array<i32>} : memref<1x2x128xf32, #tpu.memory_space<vmem>>, vector<1x2x128xf32>,
    } else {
    }
    %true = arith.constant true
    %38 = arith.xori %35, %true : i1
    %39 = arith.extui %38 : i1 to i32
    %c0_i32_18 = arith.constant 0 : i32
    %40 = arith.cmpi ne, %39, %c0_i32_18 : i32
    scf.if %40 {
      %cst_19 = arith.constant dense<0.000000e+00> : vector<128xf32>
      %41 = vector.multi_reduction <add>, %30, %cst_19 [0] : vector<16x128xf32> to vector<128xf32>
      %42 = vector.shape_cast %41 : vector<128xf32> to vector<1x128xf32>
      %43 = arith.mulf %30, %30 : vector<16x128xf32>
      %cst_20 = arith.constant dense<0.000000e+00> : vector<128xf32>
      %44 = vector.multi_reduction <add>, %43, %cst_20 [0] : vector<16x128xf32> to vector<128xf32>
      %45 = vector.shape_cast %44 : vector<128xf32> to vector<1x128xf32>
      %46 = tpu.concatenate %42, %45 in 0 : vector<1x128xf32>, vector<1x128xf32> -> vector<2x128xf32>
      %47 = vector.shape_cast %46 : vector<2x128xf32> to vector<1x2x128xf32>
      %c0_21 = arith.constant 0 : index
      %c0_22 = arith.constant 0 : index
      %c0_23 = arith.constant 0 : index
      %48 = vector.load %arg7[%c0_21, %c0_22, %c0_23] : memref<1x2x128xf32, #tpu.memory_space<vmem>>, vector<1x2x128xf32>
      tpu.vector_store %arg7[%c0_21, %c0_22, %c0_23], %47 {strides = array<i32>} : memref<1x2x128xf32, #tpu.memory_space<vmem>>, vector<1x2x128xf32>,
    } else {
    }
    return
  }
  func.func @transform_0(%arg0: i32) -> (i32, i32) {
    %c0_i32 = arith.constant 0 : i32
    %c0_i32_0 = arith.constant 0 : i32
    return %arg0, %c0_i32 : i32, i32
  }
  func.func @transform_1(%arg0: i32) -> (i32, i32, i32) {
    %c0_i32 = arith.constant 0 : i32
    %c0_i32_0 = arith.constant 0 : i32
    %c0_i32_1 = arith.constant 0 : i32
    %c0_i32_2 = arith.constant 0 : i32
    return %c0_i32, %c0_i32_0, %c0_i32_1 : i32, i32, i32
  }
  func.func @transform_2(%arg0: i32) -> (i32, i32) {
    %c0_i32 = arith.constant 0 : i32
    %c0_i32_0 = arith.constant 0 : i32
    %c0_i32_1 = arith.constant 0 : i32
    return %c0_i32, %c0_i32_0 : i32, i32
  }
  func.func @transform_3(%arg0: i32) -> (i32, i32) {
    %c0_i32 = arith.constant 0 : i32
    %c0_i32_0 = arith.constant 0 : i32
    %c0_i32_1 = arith.constant 0 : i32
    return %c0_i32, %c0_i32_0 : i32, i32
  }
  func.func @transform_4(%arg0: i32) -> (i32, i32) {
    %c0_i32 = arith.constant 0 : i32
    %c0_i32_0 = arith.constant 0 : i32
    %c0_i32_1 = arith.constant 0 : i32
    return %c0_i32, %c0_i32_0 : i32, i32
  }
  func.func @transform_5(%arg0: i32) -> (i32, i32) {
    %c0_i32 = arith.constant 0 : i32
    %c0_i32_0 = arith.constant 0 : i32
    return %arg0, %c0_i32 : i32, i32
  }
  func.func @transform_6(%arg0: i32) -> (i32, i32, i32) {
    %c0_i32 = arith.constant 0 : i32
    %c0_i32_0 = arith.constant 0 : i32
    %c0_i32_1 = arith.constant 0 : i32
    return %arg0, %c0_i32, %c0_i32_0 : i32, i32, i32
  }
}

module attributes {stable_mosaic.version = 11 : i64} {
  func.func @_layer_kernel(%arg0: i32, %arg1: memref<16x128xbf16, #tpu.memory_space<vmem>>, %arg2: memref<2x2x128xf32, #tpu.memory_space<vmem>>, %arg3: memref<1x128xf32, #tpu.memory_space<vmem>>, %arg4: memref<1x128xf32, #tpu.memory_space<vmem>>, %arg5: memref<128x128xbf16, #tpu.memory_space<vmem>>, %arg6: memref<1x128xf32, #tpu.memory_space<vmem>>, %arg7: memref<16x128xf32, #tpu.memory_space<vmem>>) attributes {dimension_semantics = [#tpu.dimension_semantics<parallel>], iteration_bounds = array<i64: 2>, scalar_prefetch = 0 : i64, scratch_operands = 0 : i64, tpu.core_type = #tpu.core_type<tc>, window_params = [{transform_indices = @transform_0, window_bounds = array<i64: 16, 128>}, {pipeline_mode = #tpu.pipeline_mode<synchronous>, transform_indices = @transform_1, window_bounds = array<i64: 2, 2, 128>}, {pipeline_mode = #tpu.pipeline_mode<synchronous>, transform_indices = @transform_2, window_bounds = array<i64: 1, 128>}, {pipeline_mode = #tpu.pipeline_mode<synchronous>, transform_indices = @transform_3, window_bounds = array<i64: 1, 128>}, {pipeline_mode = #tpu.pipeline_mode<synchronous>, transform_indices = @transform_4, window_bounds = array<i64: 128, 128>}, {pipeline_mode = #tpu.pipeline_mode<synchronous>, transform_indices = @transform_5, window_bounds = array<i64: 1, 128>}, {transform_indices = @transform_6, window_bounds = array<i64: 16, 128>}]} {
    %c0 = arith.constant 0 : index
    %c0_0 = arith.constant 0 : index
    %0 = vector.load %arg1[%c0, %c0_0] : memref<16x128xbf16, #tpu.memory_space<vmem>>, vector<16x128xbf16>
    %1 = arith.extf %0 : vector<16x128xbf16> to vector<16x128xf32>
    %c0_1 = arith.constant 0 : index
    %c0_2 = arith.constant 0 : index
    %c0_3 = arith.constant 0 : index
    %2 = vector.load %arg2[%c0_1, %c0_2, %c0_3] : memref<2x2x128xf32, #tpu.memory_space<vmem>>, vector<2x2x128xf32>
    %cst = arith.constant dense<0.000000e+00> : vector<2x128xf32>
    %3 = vector.multi_reduction <add>, %2, %cst [0] : vector<2x2x128xf32> to vector<2x128xf32>
    %4 = vector.extract_strided_slice %3 {offsets = [0, 0], sizes = [1, 128], strides = [1, 1]} : vector<2x128xf32> to vector<1x128xf32>
    %cst_4 = arith.constant 5.000000e-02 : f32
    %5 = vector.broadcast %cst_4 : f32 to vector<1x128xf32>
    %6 = arith.mulf %4, %5 : vector<1x128xf32>
    %7 = vector.extract_strided_slice %3 {offsets = [1, 0], sizes = [1, 128], strides = [1, 1]} : vector<2x128xf32> to vector<1x128xf32>
    %cst_5 = arith.constant 5.000000e-02 : f32
    %8 = vector.broadcast %cst_5 : f32 to vector<1x128xf32>
    %9 = arith.mulf %7, %8 : vector<1x128xf32>
    %10 = arith.mulf %6, %6 : vector<1x128xf32>
    %11 = arith.subf %9, %10 : vector<1x128xf32>
    %cst_6 = arith.constant 0.000000e+00 : f32
    %12 = vector.broadcast %cst_6 : f32 to vector<1x128xf32>
    %13 = arith.maximumf %11, %12 : vector<1x128xf32>
    %c0_7 = arith.constant 0 : index
    %c0_8 = arith.constant 0 : index
    %14 = vector.load %arg3[%c0_7, %c0_8] : memref<1x128xf32, #tpu.memory_space<vmem>>, vector<1x128xf32>
    %cst_9 = arith.constant 9.99999974E-6 : f32
    %15 = vector.broadcast %cst_9 : f32 to vector<1x128xf32>
    %16 = arith.addf %13, %15 : vector<1x128xf32>
    %17 = math.rsqrt %16 : vector<1x128xf32>
    %18 = arith.mulf %14, %17 : vector<1x128xf32>
    %c0_10 = arith.constant 0 : index
    %c0_11 = arith.constant 0 : index
    %19 = vector.load %arg4[%c0_10, %c0_11] : memref<1x128xf32, #tpu.memory_space<vmem>>, vector<1x128xf32>
    %20 = arith.mulf %6, %18 : vector<1x128xf32>
    %21 = arith.subf %19, %20 : vector<1x128xf32>
    %22 = vector.broadcast %18 : vector<1x128xf32> to vector<16x128xf32>
    %23 = arith.mulf %1, %22 : vector<16x128xf32>
    %24 = vector.broadcast %21 : vector<1x128xf32> to vector<16x128xf32>
    %25 = arith.addf %23, %24 : vector<16x128xf32>
    %cst_12 = arith.constant 0.000000e+00 : f32
    %26 = vector.broadcast %cst_12 : f32 to vector<16x128xf32>
    %27 = arith.maximumf %25, %26 : vector<16x128xf32>
    %28 = arith.truncf %27 : vector<16x128xf32> to vector<16x128xbf16>
    %c0_13 = arith.constant 0 : index
    %c0_14 = arith.constant 0 : index
    %29 = vector.load %arg5[%c0_13, %c0_14] : memref<128x128xbf16, #tpu.memory_space<vmem>>, vector<128x128xbf16>
    %cst_15 = arith.constant dense<0.000000e+00> : vector<16x128xf32>
    %30 = tpu.matmul %28, %29, %cst_15 {dimension_numbers = #tpu.dot_dimension_numbers<[1], [0], [0], [1], [0, 0, 1, 1], [], []>} : vector<16x128xbf16>, vector<128x128xbf16>, vector<16x128xf32> -> vector<16x128xf32>
    %c0_16 = arith.constant 0 : index
    %c0_17 = arith.constant 0 : index
    %31 = vector.load %arg6[%c0_16, %c0_17] : memref<1x128xf32, #tpu.memory_space<vmem>>, vector<1x128xf32>
    %32 = vector.broadcast %31 : vector<1x128xf32> to vector<16x128xf32>
    %33 = arith.addf %30, %32 : vector<16x128xf32>
    %c0_18 = arith.constant 0 : index
    %c0_19 = arith.constant 0 : index
    %34 = vector.load %arg7[%c0_18, %c0_19] : memref<16x128xf32, #tpu.memory_space<vmem>>, vector<16x128xf32>
    tpu.vector_store %arg7[%c0_18, %c0_19], %33 {strides = array<i32>} : memref<16x128xf32, #tpu.memory_space<vmem>>, vector<16x128xf32>,
    return
  }
  func.func @transform_0(%arg0: i32) -> (i32, i32) {
    %c0_i32 = arith.constant 0 : i32
    %c0_i32_0 = arith.constant 0 : i32
    return %arg0, %c0_i32 : i32, i32
  }
  func.func @transform_1(%arg0: i32) -> (i32, i32, i32) {
    %c0_i32 = arith.constant 0 : i32
    %c0_i32_0 = arith.constant 0 : i32
    %c0_i32_1 = arith.constant 0 : i32
    %c0_i32_2 = arith.constant 0 : i32
    return %c0_i32, %c0_i32_0, %c0_i32_1 : i32, i32, i32
  }
  func.func @transform_2(%arg0: i32) -> (i32, i32) {
    %c0_i32 = arith.constant 0 : i32
    %c0_i32_0 = arith.constant 0 : i32
    %c0_i32_1 = arith.constant 0 : i32
    return %c0_i32, %c0_i32_0 : i32, i32
  }
  func.func @transform_3(%arg0: i32) -> (i32, i32) {
    %c0_i32 = arith.constant 0 : i32
    %c0_i32_0 = arith.constant 0 : i32
    %c0_i32_1 = arith.constant 0 : i32
    return %c0_i32, %c0_i32_0 : i32, i32
  }
  func.func @transform_4(%arg0: i32) -> (i32, i32) {
    %c0_i32 = arith.constant 0 : i32
    %c0_i32_0 = arith.constant 0 : i32
    %c0_i32_1 = arith.constant 0 : i32
    return %c0_i32, %c0_i32_0 : i32, i32
  }
  func.func @transform_5(%arg0: i32) -> (i32, i32) {
    %c0_i32 = arith.constant 0 : i32
    %c0_i32_0 = arith.constant 0 : i32
    %c0_i32_1 = arith.constant 0 : i32
    return %c0_i32, %c0_i32_0 : i32, i32
  }
  func.func @transform_6(%arg0: i32) -> (i32, i32) {
    %c0_i32 = arith.constant 0 : i32
    %c0_i32_0 = arith.constant 0 : i32
    return %arg0, %c0_i32 : i32, i32
  }
}

</mosaic_0001>

<llo_original>
// kernel: tpu_custom_call.1
$region0: #{tpu_custom_call.1}
  #allocation0 [shape = 'u32[]', space=smem, size = 0x4, offset = 0x4, fixed_abs, tag = 'smem constant byte address 0x4 - core index']
  #allocation1 [shape = 'u32[72,128]{1,0:T(1,128)}', space=vmem, size = 0x9000, scoped, tag = 'internal scratch']
  %s0 = inlined_call_operand.hbm [shape: f32[8,128], index: 0, kind: input, shape index: {}]
  %s1 = inlined_call_operand.hbm [shape: f32[16,128], index: 1, kind: output, shape index: {}]
  %s2 = sld [smem:[#allocation0]]
  $region41: #{tpu_custom_call.1} parent=0
    _
  %s4 = ssub.s32 1, %s2
  %s5 = scalar_select 0, %s4, %s2
  $region1: #{tpu_custom_call.1} parent=0
    #allocation2 [shape = 'u8[4096]{0}', space=vmem, size = 0x1000, scoped, tag = 'input window, operand 0, single buffered']
    #allocation3 [shape = 's32[2]{0}', space=sflag, size = 0x8, scoped, tag = 'scoped memory for tpu_custom_call.1']
    #allocation4 [shape = 's32[2]{0}', space=sflag, size = 0x8, scoped, tag = 'scoped memory for tpu_custom_call.1']
    #allocation5 [shape = 'u8[8192]{0}', space=vmem, size = 0x2000, scoped, tag = 'output window, operand 0']
    %6 = vsyncpa [#allocation3], 0
    %7 = vsyncpa [#allocation4], 0
    %s8 = scalar_lea.sflag [#allocation4], 1
    %9 = vsyncpa %s8, 0
    loop: start=0, step=1, limit=4
    $region2: #{tpu_custom_call.1} parent=1 // loop_pre_header
      _
    $region3: #{tpu_custom_call.1} parent=1 // loop_header
      %s11 = sphi 0, %s15
      %p12 = scmp.ge.s32.totalorder %s11, 4
      %s19 = sphi 0, %s19
      %s21 = sphi 0, %s19
      %s22 = sphi 0, %s21
      %s36 = sphi 0, %s22
      %s42 = sphi 0, %s44
      %s45 = sphi 0, %s42
      %s46 = sphi 0, %s45
      %s62 = sphi 0, %s46
    $region4: #{tpu_custom_call.1} parent=1 // loop_header_branch
      %14 = sbr.rel (%p12) target = $region8
    $region5: #{tpu_custom_call.1} parent=1 // loop_body
      %s16 = ssub.s32 %s11, 1
      %s17 = ssub.s32 %s11, 2
      %s18 = sadd.s32 %s11, 1
      %s20 = sadd.s32 %s19, 1
      %p23 = scmp.eq.s32.totalorder %s11, 1
      %p24 = scmp.ne.s32.totalorder %s19, %s21
      %p25 = scmp.eq.s32.totalorder %s11, 0
      %p26 = por %p24, %p25
      %p27 = scmp.ne.s32.totalorder %s19, %s21
      %p28 = scmp.eq.s32.totalorder %s16, 1
      %p29 = por %p27, %p28
      %p30 = scmp.ne.s32.totalorder %s21, %s22
      %p31 = scmp.eq.s32.totalorder %s16, 0
      %p32 = por %p30, %p31
      %p33 = scmp.ne.s32.totalorder %s21, %s22
      %p34 = scmp.eq.s32.totalorder %s17, 1
      %p35 = por %p33, %p34
      %p37 = scmp.ne.s32.totalorder %s22, %s36
      %p38 = scmp.eq.s32.totalorder %s17, 0
      %p39 = por %p37, %p38
      %s40 = ssub.s32 %s11, %s18
      %p41 = scmp.eq.s32.totalorder %s40, 0
      %s43 = sadd.s32 %s42, 1
      %s44 = scalar_select %p41, %s42, %s43
      %p47 = pneg %p41
      %p48 = scmp.eq.s32.totalorder %s11, 1
      %p49 = por %p47, %p48
      %p50 = scmp.ne.s32.totalorder %s42, %s45
      %p51 = scmp.eq.s32.totalorder %s11, 0
      %p52 = por %p50, %p51
      %p53 = scmp.ne.s32.totalorder %s42, %s45
      %p54 = scmp.eq.s32.totalorder %s16, 1
      %p55 = por %p53, %p54
      %p56 = scmp.ne.s32.totalorder %s45, %s46
      %p57 = scmp.eq.s32.totalorder %s16, 0
      %p58 = por %p56, %p57
      %p59 = scmp.ne.s32.totalorder %s45, %s46
      %p60 = scmp.eq.s32.totalorder %s17, 1
      %p61 = por %p59, %p60
      %p63 = scmp.ne.s32.totalorder %s46, %s62
      %p64 = scmp.eq.s32.totalorder %s17, 0
      %p65 = por %p63, %p64
      %p66 = scmp.le.s32.totalorder 1, %s11
      %p67 = scmp.lt.s32.totalorder %s11, 3
      %p68 = pnand %p66, %p67
      %p69 = pneg %p68
      // Predicated region
      $region9: #{tpu_custom_call.1} parent=5 // pred_check
        _
      $region10: #{tpu_custom_call.1} parent=5 // pred_check_branch
        %71 = sbr.rel (%p68) target = $region12
      $region11: #{tpu_custom_call.1} parent=5 // pred_region
        %s72 = ssub.s32 %s11, 1
        // Predicated region
        $region13: #{tpu_custom_call.1} parent=11 // pred_check
          %p73 = pneg %p32
        $region14: #{tpu_custom_call.1} parent=11 // pred_check_branch
          %75 = sbr.rel (%p73) target = $region16
        $region15: #{tpu_custom_call.1} parent=11 // pred_region
          %77 = vsyncadd [#allocation3], 0
          %s79 = sshll.u32 %s0, 4
          %s80 = int_to_ptr.hbm [resolvable:$true] %s79
          %s81 = sshll.u32 [#allocation2], 4
          %s82 = int_to_ptr.vmem [resolvable:$true] %s81
          %84 = dma.hbm_to_vmem [thread:$0]  %s80, 128, %s82, [#allocation3]
        $region16: #{tpu_custom_call.1} parent=11 // pred_fallthru
          _
      $region12: #{tpu_custom_call.1} parent=5 // pred_fallthru
        _
      %p85 = scmp.lt.s32.totalorder %s11, 2
      // Predicated region
      $region17: #{tpu_custom_call.1} parent=5 // pred_check
        %p86 = pneg %p85
      $region18: #{tpu_custom_call.1} parent=5 // pred_check_branch
        %88 = sbr.rel (%p86) target = $region20
      $region19: #{tpu_custom_call.1} parent=5 // pred_region
        _
      $region20: #{tpu_custom_call.1} parent=5 // pred_fallthru
        _
      %p89 = scmp.le.s32.totalorder 1, %s11
      %p90 = scmp.lt.s32.totalorder %s11, 3
      %p91 = pnand %p89, %p90
      %p92 = pneg %p91
      // Predicated region
      $region21: #{tpu_custom_call.1} parent=5 // pred_check
        _
      $region22: #{tpu_custom_call.1} parent=5 // pred_check_branch
        %94 = sbr.rel (%p91) target = $region24
      $region23: #{tpu_custom_call.1} parent=5 // pred_region
        %s95 = ssub.s32 %s11, 1
        // Predicated region
        $region25: #{tpu_custom_call.1} parent=23 // pred_check
          %p96 = pneg %p32
        $region26: #{tpu_custom_call.1} parent=23 // pred_check_branch
          %98 = sbr.rel (%p96) target = $region28
        $region27: #{tpu_custom_call.1} parent=23 // pred_region
          %100 = dma.done [#allocation3], 128
        $region28: #{tpu_custom_call.1} parent=23 // pred_fallthru
          _
        %p101 = pneg %p32
        %p102 = pneg %p29
        %p103 = pneg %p58
        %p104 = pneg %p55
        %s105 = sand.u32 %s45, 1
        %s106 = scalar_lea.sflag [#allocation4], %s105
        %s107 = sand.u32 %s45, 1
        %s108 = smul.addr %s107, 8
        %s109 = scalar_lea.vmem [#allocation5], %s108
        %v110 = vld [vmem:[#allocation2] sm:$0xff]
        %v111 = vadd.f32 %v110, 1.0
        %112 = vst [vmem:[%s109] sm:$0xff] %v111
        %s113 = sand.u32 %s45, 1
        %s114 = scalar_lea.sflag [#allocation4], %s113
        %s115 = sand.u32 %s45, 1
        %s116 = smul.addr %s115, 8
        %s117 = scalar_lea.vmem [#allocation5], %s116
        // Predicated region
        $region29: #{tpu_custom_call.1} parent=23 // pred_check
          %p118 = pneg %p55
        $region30: #{tpu_custom_call.1} parent=23 // pred_check_branch
          %120 = sbr.rel (%p118) target = $region32
        $region31: #{tpu_custom_call.1} parent=23 // pred_region
          %122 = vsyncadd %s114, 0
          %s123 = smul.addr %s16, 8
          %s124 = scalar_lea.hbm %s1, %s123
          %s126 = sshll.u32 %s117, 4
          %s127 = int_to_ptr.vmem [resolvable:$true] %s126
          %s128 = sshll.u32 %s124, 4
          %s129 = int_to_ptr.hbm [resolvable:$true] %s128
          %131 = dma.vmem_to_hbm [thread:$0]  %s127, 128, %s129, %s114
        $region32: #{tpu_custom_call.1} parent=23 // pred_fallthru
          _
      $region24: #{tpu_custom_call.1} parent=5 // pred_fallthru
        _
      %p132 = scmp.le.s32.totalorder 2, %s11
      // Predicated region
      $region33: #{tpu_custom_call.1} parent=5 // pred_check
        %p133 = pneg %p132
      $region34: #{tpu_custom_call.1} parent=5 // pred_check_branch
        %135 = sbr.rel (%p133) target = $region36
      $region35: #{tpu_custom_call.1} parent=5 // pred_region
        %s136 = ssub.s32 %s11, 2
        // Predicated region
        $region37: #{tpu_custom_call.1} parent=35 // pred_check
          %p137 = pneg %p61
        $region38: #{tpu_custom_call.1} parent=35 // pred_check_branch
          %139 = sbr.rel (%p137) target = $region40
        $region39: #{tpu_custom_call.1} parent=35 // pred_region
          %s140 = sand.u32 %s46, 1
          %s141 = scalar_lea.sflag [#allocation4], %s140
          %s142 = sand.u32 %s46, 1
          %s143 = smul.addr %s142, 8
          %s144 = scalar_lea.vmem [#allocation5], %s143
          %146 = dma.done %s141, 128
        $region40: #{tpu_custom_call.1} parent=35 // pred_fallthru
          _
      $region36: #{tpu_custom_call.1} parent=5 // pred_fallthru
        _
    $region6: #{tpu_custom_call.1} parent=1 // loop_footer
      %s15 = sadd.s32 1, %s11
    $region7: #{tpu_custom_call.1} parent=1 // loop_footer_branch
      %10 = sbr.rel target = $region3
    $region8: #{tpu_custom_call.1} parent=1 // loop_exit
      _
    %147 = vsyncpa [#allocation3], 1
    %s148 = scalar_lea.sflag [#allocation3], 1
    %149 = vsyncpa %s148, 1
    %150 = vsyncpa [#allocation4], 1
    %s151 = scalar_lea.sflag [#allocation4], 1
    %152 = vsyncpa %s151, 1

// kernel: _mlp_forward_impl.3
$region0: #{_mlp_forward_impl.3}
  #allocation0 [shape = 'u32[]', space=smem, size = 0x4, offset = 0x4, fixed_abs, tag = 'smem constant byte address 0x4 - core index']
  #allocation1 [shape = 'u32[72,128]{1,0:T(1,128)}', space=vmem, size = 0x9000, scoped, tag = 'internal scratch']
  %s0 = inlined_call_operand.vmem [shape: bf16[32,128], index: 0, kind: input, shape index: {}]
  %s1 = inlined_call_operand.vmem [shape: bf16[128,128], index: 1, kind: input, shape index: {}]
  %s2 = inlined_call_operand.vmem [shape: bf16[32,128], index: 2, kind: output, shape index: {0}]
  %s3 = inlined_call_operand.vmem [shape: f32[2,2,128], index: 3, kind: output, shape index: {1}]
  %4 = xla_tuple %s2, %s3
  %s5 = sld [smem:[#allocation0]]
  $region57: #{_mlp_forward_impl.3} parent=0
    _
  %s7 = ssub.s32 1, %s5
  %s8 = scalar_select 0, %s7, %s5
  loop: start=0, step=1, limit=4
  $region2: #{_mlp_forward_impl.3} parent=0 // loop_pre_header
    _
  $region3: #{_mlp_forward_impl.3} parent=0 // loop_header
    %s10 = sphi 0, %s14
    %p11 = scmp.ge.s32.totalorder %s10, 4
    %s20 = sphi 0, %s22
    %s23 = sphi 0, %s20
    %s24 = sphi 0, %s23
    %s40 = sphi 0, %s24
    %s44 = sphi 0, %s44
    %s46 = sphi 0, %s44
    %s47 = sphi 0, %s46
    %s61 = sphi 0, %s47
    %s67 = sphi 0, %s69
    %s70 = sphi 0, %s67
    %s71 = sphi 0, %s70
    %s87 = sphi 0, %s71
    %s93 = sphi 0, %s95
    %s96 = sphi 0, %s93
    %s97 = sphi 0, %s96
    %s113 = sphi 0, %s97
  $region4: #{_mlp_forward_impl.3} parent=0 // loop_header_branch
    %13 = sbr.rel (%p11) target = $region8
  $region5: #{_mlp_forward_impl.3} parent=0 // loop_body
    %s15 = ssub.s32 %s10, 1
    %s16 = ssub.s32 %s10, 2
    %s17 = sadd.s32 %s10, 1
    %s18 = ssub.s32 %s10, %s17
    %p19 = scmp.eq.s32.totalorder %s18, 0
    %s21 = sadd.s32 %s20, 1
    %s22 = scalar_select %p19, %s20, %s21
    %p25 = pneg %p19
    %p26 = scmp.eq.s32.totalorder %s10, 1
    %p27 = por %p25, %p26
    %p28 = scmp.ne.s32.totalorder %s20, %s23
    %p29 = scmp.eq.s32.totalorder %s10, 0
    %p30 = por %p28, %p29
    %p31 = scmp.ne.s32.totalorder %s20, %s23
    %p32 = scmp.eq.s32.totalorder %s15, 1
    %p33 = por %p31, %p32
    %p34 = scmp.ne.s32.totalorder %s23, %s24
    %p35 = scmp.eq.s32.totalorder %s15, 0
    %p36 = por %p34, %p35
    %p37 = scmp.ne.s32.totalorder %s23, %s24
    %p38 = scmp.eq.s32.totalorder %s16, 1
    %p39 = por %p37, %p38
    %p41 = scmp.ne.s32.totalorder %s24, %s40
    %p42 = scmp.eq.s32.totalorder %s16, 0
    %p43 = por %p41, %p42
    %s45 = sadd.s32 %s44, 1
    %p48 = scmp.eq.s32.totalorder %s10, 1
    %p49 = scmp.ne.s32.totalorder %s44, %s46
    %p50 = scmp.eq.s32.totalorder %s10, 0
    %p51 = por %p49, %p50
    %p52 = scmp.ne.s32.totalorder %s44, %s46
    %p53 = scmp.eq.s32.totalorder %s15, 1
    %p54 = por %p52, %p53
    %p55 = scmp.ne.s32.totalorder %s46, %s47
    %p56 = scmp.eq.s32.totalorder %s15, 0
    %p57 = por %p55, %p56
    %p58 = scmp.ne.s32.totalorder %s46, %s47
    %p59 = scmp.eq.s32.totalorder %s16, 1
    %p60 = por %p58, %p59
    %p62 = scmp.ne.s32.totalorder %s47, %s61
    %p63 = scmp.eq.s32.totalorder %s16, 0
    %p64 = por %p62, %p63
    %s65 = ssub.s32 %s10, %s17
    %p66 = scmp.eq.s32.totalorder %s65, 0
    %s68 = sadd.s32 %s67, 1
    %s69 = scalar_select %p66, %s67, %s68
    %p72 = pneg %p66
    %p73 = scmp.eq.s32.totalorder %s10, 1
    %p74 = por %p72, %p73
    %p75 = scmp.ne.s32.totalorder %s67, %s70
    %p76 = scmp.eq.s32.totalorder %s10, 0
    %p77 = por %p75, %p76
    %p78 = scmp.ne.s32.totalorder %s67, %s70
    %p79 = scmp.eq.s32.totalorder %s15, 1
    %p80 = por %p78, %p79
    %p81 = scmp.ne.s32.totalorder %s70, %s71
    %p82 = scmp.eq.s32.totalorder %s15, 0
    %p83 = por %p81, %p82
    %p84 = scmp.ne.s32.totalorder %s70, %s71
    %p85 = scmp.eq.s32.totalorder %s16, 1
    %p86 = por %p84, %p85
    %p88 = scmp.ne.s32.totalorder %s71, %s87
    %p89 = scmp.eq.s32.totalorder %s16, 0
    %p90 = por %p88, %p89
    %s91 = ssub.s32 %s10, %s17
    %p92 = scmp.eq.s32.totalorder %s91, 0
    %s94 = sadd.s32 %s93, 1
    %s95 = scalar_select %p92, %s93, %s94
    %p98 = pneg %p92
    %p99 = scmp.eq.s32.totalorder %s10, 1
    %p100 = por %p98, %p99
    %p101 = scmp.ne.s32.totalorder %s93, %s96
    %p102 = scmp.eq.s32.totalorder %s10, 0
    %p103 = por %p101, %p102
    %p104 = scmp.ne.s32.totalorder %s93, %s96
    %p105 = scmp.eq.s32.totalorder %s15, 1
    %p106 = por %p104, %p105
    %p107 = scmp.ne.s32.totalorder %s96, %s97
    %p108 = scmp.eq.s32.totalorder %s15, 0
    %p109 = por %p107, %p108
    %p110 = scmp.ne.s32.totalorder %s96, %s97
    %p111 = scmp.eq.s32.totalorder %s16, 1
    %p112 = por %p110, %p111
    %p114 = scmp.ne.s32.totalorder %s97, %s113
    %p115 = scmp.eq.s32.totalorder %s16, 0
    %p116 = por %p114, %p115
    %p117 = scmp.le.s32.totalorder 1, %s10
    %p118 = scmp.lt.s32.totalorder %s10, 3
    %p119 = pnand %p117, %p118
    %p120 = pneg %p119
    // Predicated region
    $region9: #{_mlp_forward_impl.3} parent=5 // pred_check
      _
    $region10: #{_mlp_forward_impl.3} parent=5 // pred_check_branch
      %122 = sbr.rel (%p119) target = $region12
    $region11: #{_mlp_forward_impl.3} parent=5 // pred_region
      %s123 = ssub.s32 %s10, 1
      // Predicated region
      $region13: #{_mlp_forward_impl.3} parent=11 // pred_check
        %p124 = pneg %p57
      $region14: #{_mlp_forward_impl.3} parent=11 // pred_check_branch
        %126 = sbr.rel (%p124) target = $region16
      $region15: #{_mlp_forward_impl.3} parent=11 // pred_region
        _
      $region16: #{_mlp_forward_impl.3} parent=11 // pred_fallthru
        _
    $region12: #{_mlp_forward_impl.3} parent=5 // pred_fallthru
      _
    %p127 = scmp.lt.s32.totalorder %s10, 2
    // Predicated region
    $region17: #{_mlp_forward_impl.3} parent=5 // pred_check
      %p128 = pneg %p127
    $region18: #{_mlp_forward_impl.3} parent=5 // pred_check_branch
      %130 = sbr.rel (%p128) target = $region20
    $region19: #{_mlp_forward_impl.3} parent=5 // pred_region
      // Predicated region
      $region21: #{_mlp_forward_impl.3} parent=19 // pred_check
        %p131 = pneg %p30
      $region22: #{_mlp_forward_impl.3} parent=19 // pred_check_branch
        %133 = sbr.rel (%p131) target = $region24
      $region23: #{_mlp_forward_impl.3} parent=19 // pred_region
        %s134 = smul.u32 2, %s10
        %p135 = scmp.lt.s32.totalorder %s134, 3
        %s136 = scalar_select %p135, %s134, 3
        %s137 = smul.addr %s136, 4
        %s138 = scalar_lea.vmem %s0, %s137
        %s139 = smul.u32 2, %s10
      $region24: #{_mlp_forward_impl.3} parent=19 // pred_fallthru
        _
    $region20: #{_mlp_forward_impl.3} parent=5 // pred_fallthru
      _
    %p140 = scmp.le.s32.totalorder 1, %s10
    %p141 = scmp.lt.s32.totalorder %s10, 3
    %p142 = pnand %p140, %p141
    %p143 = pneg %p142
    // Predicated region
    $region25: #{_mlp_forward_impl.3} parent=5 // pred_check
      _
    $region26: #{_mlp_forward_impl.3} parent=5 // pred_check_branch
      %145 = sbr.rel (%p142) target = $region28
    $region27: #{_mlp_forward_impl.3} parent=5 // pred_region
      %s146 = ssub.s32 %s10, 1
      %s147 = smul.u32 2, %s15
      %p148 = scmp.lt.s32.totalorder %s147, 3
      %s149 = scalar_select %p148, %s147, 3
      %s150 = smul.addr %s149, 4
      %s151 = scalar_lea.vmem %s0, %s150
      %p152 = pneg %p36
      %p153 = pneg %p33
      %p154 = pneg %p57
      %p155 = pneg %p54
      %p156 = pneg %p83
      %p157 = pneg %p80
      %s158 = smul.u32 2, %s15
      %p159 = scmp.lt.s32.totalorder %s158, 3
      %s160 = scalar_select %p159, %s158, 3
      %s161 = smul.addr %s160, 4
      %s162 = scalar_lea.vmem %s2, %s161
      %p163 = pneg %p109
      %p164 = pneg %p106
      %p165 = scmp.lt.s32.totalorder %s15, 1
      %s166 = scalar_select %p165, %s15, 1
      %s167 = smul.addr %s166, 2
      %s168 = scalar_lea.vmem %s3, %s167
      %s169 = smul.u32 2, %s15
      %p170 = scmp.lt.s32.totalorder %s169, 3
      %s171 = scalar_select %p170, %s169, 3
      %s172 = smul.addr %s171, 4
      %s173 = scalar_lea.vmem %s0, %s172
      %s174 = smul.u32 2, %s15
      %s175 = smul.u32 2, %s15
      %p176 = scmp.lt.s32.totalorder %s175, 3
      %s177 = scalar_select %p176, %s175, 3
      %s178 = smul.addr %s177, 4
      %s179 = scalar_lea.vmem %s2, %s178
      %s180 = smul.u32 2, %s15
      %p181 = scmp.lt.s32.totalorder %s15, 1
      %s182 = scalar_select %p181, %s15, 1
      %s183 = smul.addr %s182, 2
      %s184 = scalar_lea.vmem %s3, %s183
      %v185 = vld [vmem:[%s173] sm:$0xf]
      %v186 = vld [vmem:[%s173 + $0x4] sm:$0xf]
      %v187 = vld [vmem:[%s1] sm:$0xf]
      %v188 = vld [vmem:[%s1 + $0x4] sm:$0xf]
      %v189 = vld [vmem:[%s1 + $0x8] sm:$0xf]
      %v190 = vld [vmem:[%s1 + $0xc] sm:$0xf]
      %v191 = vld [vmem:[%s1 + $0x10] sm:$0xf]
      %v192 = vld [vmem:[%s1 + $0x14] sm:$0xf]
      %v193 = vld [vmem:[%s1 + $0x18] sm:$0xf]
      %v194 = vld [vmem:[%s1 + $0x1c] sm:$0xf]
      %v195 = vld [vmem:[%s1 + $0x20] sm:$0xf]
      %v196 = vld [vmem:[%s1 + $0x24] sm:$0xf]
      %v197 = vld [vmem:[%s1 + $0x28] sm:$0xf]
      %v198 = vld [vmem:[%s1 + $0x2c] sm:$0xf]
      %v199 = vld [vmem:[%s1 + $0x30] sm:$0xf]
      %v200 = vld [vmem:[%s1 + $0x34] sm:$0xf]
      %v201 = vld [vmem:[%s1 + $0x38] sm:$0xf]
      %v202 = vld [vmem:[%s1 + $0x3c] sm:$0xf]
      %v205 = vunpack.c.l.b16 %v185
      %v206 = vunpack.c.l.b16 %v186
      %v207 = vpack.c.b16 %v206, %v205
      %v225 = vunpack.c.l.b16 %v187
      %v226 = vunpack.c.l.b16 %v188
      %v227 = vunpack.c.l.b16 %v189
      %v228 = vunpack.c.l.b16 %v190
      %v229 = vunpack.c.l.b16 %v191
      %v230 = vunpack.c.l.b16 %v192
      %v231 = vunpack.c.l.b16 %v193
      %v232 = vunpack.c.l.b16 %v194
      %v233 = vunpack.c.l.b16 %v195
      %v234 = vunpack.c.l.b16 %v196
      %v235 = vunpack.c.l.b16 %v197
      %v236 = vunpack.c.l.b16 %v198
      %v237 = vunpack.c.l.b16 %v199
      %v238 = vunpack.c.l.b16 %v200
      %v239 = vunpack.c.l.b16 %v201
      %v240 = vunpack.c.l.b16 %v202
      %v241 = vpack.c.b16 %v226, %v225
      %v242 = vpack.c.b16 %v228, %v227
      %v243 = vpack.c.b16 %v230, %v229
      %v244 = vpack.c.b16 %v232, %v231
      %v245 = vpack.c.b16 %v234, %v233
      %v246 = vpack.c.b16 %v236, %v235
      %v247 = vpack.c.b16 %v238, %v237
      %v248 = vpack.c.b16 %v240, %v239
      %257 = vmatpush.bf16.msra.mxu0 %v248
      %258 = vmatpush.bf16.msra.mxu0 %v247
      %259 = vmatpush.bf16.msra.mxu0 %v246
      %260 = vmatpush.bf16.msra.mxu0 %v245
      %261 = vmatpush.bf16.msra.mxu0 %v244
      %262 = vmatpush.bf16.msra.mxu0 %v243
      %263 = vmatpush.bf16.msra.mxu0 %v242
      %264 = vmatpush.bf16.msra.mxu0 %v241
      %265 = vmatmul.bf16.gmra.mxu0 %v207
      %v266 = vpop.f32.mrf.mxu0
      %v267 = vadd.f32 0.0, %v266
      %v268 = vpop.f32.mrf.mxu0
      %v269 = vadd.f32 0.0, %v268
      %270 = vdwg.mxu0
      %v271 = vpack.c.bf16 %v267, %v267
      %v272 = vpack.c.bf16 %v269, %v269
      %273 = vst [vmem:[%s179] sm:$0xf] %v271
      %274 = vst [vmem:[%s179 + $0x4] sm:$0xf] %v272
      %s275 = sadd.s32 %s15, 1
      %s276 = smul.u32 %s275, 16
      %p277 = scmp.gt.s32.totalorder %s276, 20
      // Predicated region
      $region29: #{_mlp_forward_impl.3} parent=27 // pred_check
        %p278 = pneg %p277
      $region30: #{_mlp_forward_impl.3} parent=27 // pred_check_branch
        %280 = sbr.rel (%p278) target = $region32
      $region31: #{_mlp_forward_impl.3} parent=27 // pred_region
        %v281 = vlaneseq
        %v282 = vshrl.u32 %v281, 7
        %v283 = vadd.s32 %v282, 8
        %s284 = smul.u32 %s15, 16
        %v285 = vstv %s284
        %v286 = vadd.s32 %v282, %v285
        %v287 = vadd.s32 %v283, %v285
        %vm288 = vcmp.lt.s32.totalorder %v286, 20
        %vm289 = vcmp.lt.s32.totalorder %v287, 20
        %v290 = vsel %vm288, 1, 0
        %v291 = vsel %vm289, 1, 0
        %vm292 = vcmp.eq.s32.totalorder %v290, 1
        %vm293 = vcmp.eq.s32.totalorder %v291, 1
        %v294 = vsel %vm292, %v267, 0.0
        %v295 = vsel %vm293, %v269, 0.0
        %v296 = vadd.f32 %v294, %v295
        %v297 = vrot.slane %v296, 4
        %v298 = vadd.f32 %v296, %v297
        %v299 = vrot.slane %v298, 2
        %v300 = vadd.f32 %v298, %v299
        %v301 = vrot.slane %v300, 1
        %v302 = vadd.f32 %v300, %v301
        %v303 = vmul.f32 %v294, %v294
        %v304 = vmul.f32 %v295, %v295
        %v305 = vadd.f32 %v303, %v304
        %v306 = vrot.slane %v305, 4
        %v307 = vadd.f32 %v305, %v306
        %v308 = vrot.slane %v307, 2
        %v309 = vadd.f32 %v307, %v308
        %v310 = vrot.slane %v309, 1
        %v311 = vadd.f32 %v309, %v310
        %vm312 = vcmask 1040384
        %v313 = vsel %vm312, %v302, %v311
        %314 = vst [vmem:[%s184] sm:$0x3] %v313
      $region32: #{_mlp_forward_impl.3} parent=27 // pred_fallthru
        _
      %p315 = scmp.le.s32.totalorder %s276, 20
      // Predicated region
      $region33: #{_mlp_forward_impl.3} parent=27 // pred_check
        %p316 = pneg %p315
      $region34: #{_mlp_forward_impl.3} parent=27 // pred_check_branch
        %318 = sbr.rel (%p316) target = $region36
      $region35: #{_mlp_forward_impl.3} parent=27 // pred_region
        %v319 = vadd.f32 %v267, %v269
        %v320 = vrot.slane %v319, 4
        %v321 = vadd.f32 %v319, %v320
        %v322 = vrot.slane %v321, 2
        %v323 = vadd.f32 %v321, %v322
        %v324 = vrot.slane %v323, 1
        %v325 = vadd.f32 %v323, %v324
        %v326 = vmul.f32 %v267, %v267
        %v327 = vmul.f32 %v269, %v269
        %v328 = vadd.f32 %v326, %v327
        %v329 = vrot.slane %v328, 4
        %v330 = vadd.f32 %v328, %v329
        %v331 = vrot.slane %v330, 2
        %v332 = vadd.f32 %v330, %v331
        %v333 = vrot.slane %v332, 1
        %v334 = vadd.f32 %v332, %v333
        %vm335 = vcmask 1040384
        %v336 = vsel %vm335, %v325, %v334
        %337 = vst [vmem:[%s184] sm:$0x3] %v336
      $region36: #{_mlp_forward_impl.3} parent=27 // pred_fallthru
        _
      %s338 = smul.u32 2, %s15
      %p339 = scmp.lt.s32.totalorder %s338, 3
      %s340 = scalar_select %p339, %s338, 3
      %s341 = smul.addr %s340, 4
      %s342 = scalar_lea.vmem %s2, %s341
      %p343 = scmp.lt.s32.totalorder %s15, 1
      %s344 = scalar_select %p343, %s15, 1
      %s345 = smul.addr %s344, 2
      %s346 = scalar_lea.vmem %s3, %s345
      // Predicated region
      $region37: #{_mlp_forward_impl.3} parent=27 // pred_check
        %p347 = pneg %p80
      $region38: #{_mlp_forward_impl.3} parent=27 // pred_check_branch
        %349 = sbr.rel (%p347) target = $region40
      $region39: #{_mlp_forward_impl.3} parent=27 // pred_region
        %s350 = smul.u32 2, %s15
      $region40: #{_mlp_forward_impl.3} parent=27 // pred_fallthru
        _
      // Predicated region
      $region41: #{_mlp_forward_impl.3} parent=27 // pred_check
        %p351 = pneg %p106
      $region42: #{_mlp_forward_impl.3} parent=27 // pred_check_branch
        %353 = sbr.rel (%p351) target = $region44
      $region43: #{_mlp_forward_impl.3} parent=27 // pred_region
        _
      $region44: #{_mlp_forward_impl.3} parent=27 // pred_fallthru
        _
    $region28: #{_mlp_forward_impl.3} parent=5 // pred_fallthru
      _
    %p354 = scmp.le.s32.totalorder 2, %s10
    // Predicated region
    $region45: #{_mlp_forward_impl.3} parent=5 // pred_check
      %p355 = pneg %p354
    $region46: #{_mlp_forward_impl.3} parent=5 // pred_check_branch
      %357 = sbr.rel (%p355) target = $region48
    $region47: #{_mlp_forward_impl.3} parent=5 // pred_region
      %s358 = ssub.s32 %s10, 2
      // Predicated region
      $region49: #{_mlp_forward_impl.3} parent=47 // pred_check
        %p359 = pneg %p86
      $region50: #{_mlp_forward_impl.3} parent=47 // pred_check_branch
        %361 = sbr.rel (%p359) target = $region52
      $region51: #{_mlp_forward_impl.3} parent=47 // pred_region
        %s362 = smul.u32 2, %s16
        %p363 = scmp.lt.s32.totalorder %s362, 3
        %s364 = scalar_select %p363, %s362, 3
        %s365 = smul.addr %s364, 4
        %s366 = scalar_lea.vmem %s2, %s365
      $region52: #{_mlp_forward_impl.3} parent=47 // pred_fallthru
        _
      // Predicated region
      $region53: #{_mlp_forward_impl.3} parent=47 // pred_check
        %p367 = pneg %p112
      $region54: #{_mlp_forward_impl.3} parent=47 // pred_check_branch
        %369 = sbr.rel (%p367) target = $region56
      $region55: #{_mlp_forward_impl.3} parent=47 // pred_region
        %p370 = scmp.lt.s32.totalorder %s16, 1
        %s371 = scalar_select %p370, %s16, 1
        %s372 = smul.addr %s371, 2
        %s373 = scalar_lea.vmem %s3, %s372
      $region56: #{_mlp_forward_impl.3} parent=47 // pred_fallthru
        _
    $region48: #{_mlp_forward_impl.3} parent=5 // pred_fallthru
      _
  $region6: #{_mlp_forward_impl.3} parent=0 // loop_footer
    %s14 = sadd.s32 1, %s10
  $region7: #{_mlp_forward_impl.3} parent=0 // loop_footer_branch
    %9 = sbr.rel target = $region3
  $region8: #{_mlp_forward_impl.3} parent=0 // loop_exit
    _

// kernel: _mlp_forward_impl.5
$region0: #{_mlp_forward_impl.5}
  #allocation0 [shape = 'u32[]', space=smem, size = 0x4, offset = 0x4, fixed_abs, tag = 'smem constant byte address 0x4 - core index']
  #allocation1 [shape = 'u32[72,128]{1,0:T(1,128)}', space=vmem, size = 0x9000, scoped, tag = 'internal scratch']
  %s0 = inlined_call_operand.vmem [shape: bf16[32,128], index: 0, kind: input, shape index: {}]
  %s1 = inlined_call_operand.vmem [shape: f32[2,2,128], index: 1, kind: input, shape index: {}]
  %s2 = inlined_call_operand.vmem [shape: f32[1,128], index: 2, kind: input, shape index: {}]
  %s3 = inlined_call_operand.vmem [shape: f32[1,128], index: 3, kind: input, shape index: {}]
  %s4 = inlined_call_operand.hbm [shape: bf16[128,128], index: 4, kind: input, shape index: {}]
  %s5 = inlined_call_operand.vmem [shape: f32[1,128], index: 5, kind: input, shape index: {}]
  %s6 = inlined_call_operand.vmem [shape: f32[32,128], index: 6, kind: output, shape index: {}]
  %s7 = sld [smem:[#allocation0]]
  $region61: #{_mlp_forward_impl.5} parent=0
    _
  %s9 = ssub.s32 1, %s7
  %s10 = scalar_select 0, %s9, %s7
  $region1: #{_mlp_forward_impl.5} parent=0
    #allocation2 [shape = 'u8[32768]{0}', space=vmem, size = 0x8000, scoped, tag = 'input window, operand 4, single buffered']
    #allocation3 [shape = 's32[2]{0}', space=sflag, size = 0x8, scoped, tag = 'scoped memory for _mlp_forward_impl.5']
    %11 = vsyncpa [#allocation3], 0
    loop: start=0, step=1, limit=4
    $region2: #{_mlp_forward_impl.5} parent=1 // loop_pre_header
      _
    $region3: #{_mlp_forward_impl.5} parent=1 // loop_header
      %s13 = sphi 0, %s17
      %p14 = scmp.ge.s32.totalorder %s13, 4
      %s23 = sphi 0, %s25
      %s26 = sphi 0, %s23
      %s27 = sphi 0, %s26
      %s43 = sphi 0, %s27
      %s47 = sphi 0, %s47
      %s49 = sphi 0, %s47
      %s50 = sphi 0, %s49
      %s64 = sphi 0, %s50
      %s68 = sphi 0, %s68
      %s70 = sphi 0, %s68
      %s71 = sphi 0, %s70
      %s85 = sphi 0, %s71
      %s89 = sphi 0, %s89
      %s91 = sphi 0, %s89
      %s92 = sphi 0, %s91
      %s106 = sphi 0, %s92
      %s110 = sphi 0, %s110
      %s112 = sphi 0, %s110
      %s113 = sphi 0, %s112
      %s127 = sphi 0, %s113
      %s131 = sphi 0, %s131
      %s133 = sphi 0, %s131
      %s134 = sphi 0, %s133
      %s148 = sphi 0, %s134
      %s154 = sphi 0, %s156
      %s157 = sphi 0, %s154
      %s158 = sphi 0, %s157
      %s174 = sphi 0, %s158
    $region4: #{_mlp_forward_impl.5} parent=1 // loop_header_branch
      %16 = sbr.rel (%p14) target = $region8
    $region5: #{_mlp_forward_impl.5} parent=1 // loop_body
      %s18 = ssub.s32 %s13, 1
      %s19 = ssub.s32 %s13, 2
      %s20 = sadd.s32 %s13, 1
      %s21 = ssub.s32 %s13, %s20
      %p22 = scmp.eq.s32.totalorder %s21, 0
      %s24 = sadd.s32 %s23, 1
      %s25 = scalar_select %p22, %s23, %s24
      %p28 = pneg %p22
      %p29 = scmp.eq.s32.totalorder %s13, 1
      %p30 = por %p28, %p29
      %p31 = scmp.ne.s32.totalorder %s23, %s26
      %p32 = scmp.eq.s32.totalorder %s13, 0
      %p33 = por %p31, %p32
      %p34 = scmp.ne.s32.totalorder %s23, %s26
      %p35 = scmp.eq.s32.totalorder %s18, 1
      %p36 = por %p34, %p35
      %p37 = scmp.ne.s32.totalorder %s26, %s27
      %p38 = scmp.eq.s32.totalorder %s18, 0
      %p39 = por %p37, %p38
      %p40 = scmp.ne.s32.totalorder %s26, %s27
      %p41 = scmp.eq.s32.totalorder %s19, 1
      %p42 = por %p40, %p41
      %p44 = scmp.ne.s32.totalorder %s27, %s43
      %p45 = scmp.eq.s32.totalorder %s19, 0
      %p46 = por %p44, %p45
      %s48 = sadd.s32 %s47, 1
      %p51 = scmp.eq.s32.totalorder %s13, 1
      %p52 = scmp.ne.s32.totalorder %s47, %s49
      %p53 = scmp.eq.s32.totalorder %s13, 0
      %p54 = por %p52, %p53
      %p55 = scmp.ne.s32.totalorder %s47, %s49
      %p56 = scmp.eq.s32.totalorder %s18, 1
      %p57 = por %p55, %p56
      %p58 = scmp.ne.s32.totalorder %s49, %s50
      %p59 = scmp.eq.s32.totalorder %s18, 0
      %p60 = por %p58, %p59
      %p61 = scmp.ne.s32.totalorder %s49, %s50
      %p62 = scmp.eq.s32.totalorder %s19, 1
      %p63 = por %p61, %p62
      %p65 = scmp.ne.s32.totalorder %s50, %s64
      %p66 = scmp.eq.s32.totalorder %s19, 0
      %p67 = por %p65, %p66
      %s69 = sadd.s32 %s68, 1
      %p72 = scmp.eq.s32.totalorder %s13, 1
      %p73 = scmp.ne.s32.totalorder %s68, %s70
      %p74 = scmp.eq.s32.totalorder %s13, 0
      %p75 = por %p73, %p74
      %p76 = scmp.ne.s32.totalorder %s68, %s70
      %p77 = scmp.eq.s32.totalorder %s18, 1
      %p78 = por %p76, %p77
      %p79 = scmp.ne.s32.totalorder %s70, %s71
      %p80 = scmp.eq.s32.totalorder %s18, 0
      %p81 = por %p79, %p80
      %p82 = scmp.ne.s32.totalorder %s70, %s71
      %p83 = scmp.eq.s32.totalorder %s19, 1
      %p84 = por %p82, %p83
      %p86 = scmp.ne.s32.totalorder %s71, %s85
      %p87 = scmp.eq.s32.totalorder %s19, 0
      %p88 = por %p86, %p87
      %s90 = sadd.s32 %s89, 1
      %p93 = scmp.eq.s32.totalorder %s13, 1
      %p94 = scmp.ne.s32.totalorder %s89, %s91
      %p95 = scmp.eq.s32.totalorder %s13, 0
      %p96 = por %p94, %p95
      %p97 = scmp.ne.s32.totalorder %s89, %s91
      %p98 = scmp.eq.s32.totalorder %s18, 1
      %p99 = por %p97, %p98
      %p100 = scmp.ne.s32.totalorder %s91, %s92
      %p101 = scmp.eq.s32.totalorder %s18, 0
      %p102 = por %p100, %p101
      %p103 = scmp.ne.s32.totalorder %s91, %s92
      %p104 = scmp.eq.s32.totalorder %s19, 1
      %p105 = por %p103, %p104
      %p107 = scmp.ne.s32.totalorder %s92, %s106
      %p108 = scmp.eq.s32.totalorder %s19, 0
      %p109 = por %p107, %p108
      %s111 = sadd.s32 %s110, 1
      %p114 = scmp.eq.s32.totalorder %s13, 1
      %p115 = scmp.ne.s32.totalorder %s110, %s112
      %p116 = scmp.eq.s32.totalorder %s13, 0
      %p117 = por %p115, %p116
      %p118 = scmp.ne.s32.totalorder %s110, %s112
      %p119 = scmp.eq.s32.totalorder %s18, 1
      %p120 = por %p118, %p119
      %p121 = scmp.ne.s32.totalorder %s112, %s113
      %p122 = scmp.eq.s32.totalorder %s18, 0
      %p123 = por %p121, %p122
      %p124 = scmp.ne.s32.totalorder %s112, %s113
      %p125 = scmp.eq.s32.totalorder %s19, 1
      %p126 = por %p124, %p125
      %p128 = scmp.ne.s32.totalorder %s113, %s127
      %p129 = scmp.eq.s32.totalorder %s19, 0
      %p130 = por %p128, %p129
      %s132 = sadd.s32 %s131, 1
      %p135 = scmp.eq.s32.totalorder %s13, 1
      %p136 = scmp.ne.s32.totalorder %s131, %s133
      %p137 = scmp.eq.s32.totalorder %s13, 0
      %p138 = por %p136, %p137
      %p139 = scmp.ne.s32.totalorder %s131, %s133
      %p140 = scmp.eq.s32.totalorder %s18, 1
      %p141 = por %p139, %p140
      %p142 = scmp.ne.s32.totalorder %s133, %s134
      %p143 = scmp.eq.s32.totalorder %s18, 0
      %p144 = por %p142, %p143
      %p145 = scmp.ne.s32.totalorder %s133, %s134
      %p146 = scmp.eq.s32.totalorder %s19, 1
      %p147 = por %p145, %p146
      %p149 = scmp.ne.s32.totalorder %s134, %s148
      %p150 = scmp.eq.s32.totalorder %s19, 0
      %p151 = por %p149, %p150
      %s152 = ssub.s32 %s13, %s20
      %p153 = scmp.eq.s32.totalorder %s152, 0
      %s155 = sadd.s32 %s154, 1
      %s156 = scalar_select %p153, %s154, %s155
      %p159 = pneg %p153
      %p160 = scmp.eq.s32.totalorder %s13, 1
      %p161 = por %p159, %p160
      %p162 = scmp.ne.s32.totalorder %s154, %s157
      %p163 = scmp.eq.s32.totalorder %s13, 0
      %p164 = por %p162, %p163
      %p165 = scmp.ne.s32.totalorder %s154, %s157
      %p166 = scmp.eq.s32.totalorder %s18, 1
      %p167 = por %p165, %p166
      %p168 = scmp.ne.s32.totalorder %s157, %s158
      %p169 = scmp.eq.s32.totalorder %s18, 0
      %p170 = por %p168, %p169
      %p171 = scmp.ne.s32.totalorder %s157, %s158
      %p172 = scmp.eq.s32.totalorder %s19, 1
      %p173 = por %p171, %p172
      %p175 = scmp.ne.s32.totalorder %s158, %s174
      %p176 = scmp.eq.s32.totalorder %s19, 0
      %p177 = por %p175, %p176
      %p178 = scmp.le.s32.totalorder 1, %s13
      %p179 = scmp.lt.s32.totalorder %s13, 3
      %p180 = pnand %p178, %p179
      %p181 = pneg %p180
      // Predicated region
      $region9: #{_mlp_forward_impl.5} parent=5 // pred_check
        _
      $region10: #{_mlp_forward_impl.5} parent=5 // pred_check_branch
        %183 = sbr.rel (%p180) target = $region12
      $region11: #{_mlp_forward_impl.5} parent=5 // pred_region
        %s184 = ssub.s32 %s13, 1
        // Predicated region
        $region13: #{_mlp_forward_impl.5} parent=11 // pred_check
          %p185 = pneg %p60
        $region14: #{_mlp_forward_impl.5} parent=11 // pred_check_branch
          %187 = sbr.rel (%p185) target = $region16
        $region15: #{_mlp_forward_impl.5} parent=11 // pred_region
          _
        $region16: #{_mlp_forward_impl.5} parent=11 // pred_fallthru
          _
        // Predicated region
        $region17: #{_mlp_forward_impl.5} parent=11 // pred_check
          %p188 = pneg %p81
        $region18: #{_mlp_forward_impl.5} parent=11 // pred_check_branch
          %190 = sbr.rel (%p188) target = $region20
        $region19: #{_mlp_forward_impl.5} parent=11 // pred_region
          _
        $region20: #{_mlp_forward_impl.5} parent=11 // pred_fallthru
          _
        // Predicated region
        $region21: #{_mlp_forward_impl.5} parent=11 // pred_check
          %p191 = pneg %p102
        $region22: #{_mlp_forward_impl.5} parent=11 // pred_check_branch
          %193 = sbr.rel (%p191) target = $region24
        $region23: #{_mlp_forward_impl.5} parent=11 // pred_region
          _
        $region24: #{_mlp_forward_impl.5} parent=11 // pred_fallthru
          _
        // Predicated region
        $region25: #{_mlp_forward_impl.5} parent=11 // pred_check
          %p194 = pneg %p123
        $region26: #{_mlp_forward_impl.5} parent=11 // pred_check_branch
          %196 = sbr.rel (%p194) target = $region28
        $region27: #{_mlp_forward_impl.5} parent=11 // pred_region
          %198 = vsyncadd [#allocation3], 0
          %s199 = sshll.u32 %s4, 4
          %s200 = int_to_ptr.hbm [resolvable:$true] %s199
          %s201 = sshll.u32 [#allocation2], 4
          %s202 = int_to_ptr.vmem [resolvable:$true] %s201
          %207 = dma.hbm_to_vmem [thread:$0]  %s200, 1024, %s202, [#allocation3], 64, 64, 4
        $region28: #{_mlp_forward_impl.5} parent=11 // pred_fallthru
          _
        // Predicated region
        $region29: #{_mlp_forward_impl.5} parent=11 // pred_check
          %p208 = pneg %p144
        $region30: #{_mlp_forward_impl.5} parent=11 // pred_check_branch
          %210 = sbr.rel (%p208) target = $region32
        $region31: #{_mlp_forward_impl.5} parent=11 // pred_region
          _
        $region32: #{_mlp_forward_impl.5} parent=11 // pred_fallthru
          _
      $region12: #{_mlp_forward_impl.5} parent=5 // pred_fallthru
        _
      %p211 = scmp.lt.s32.totalorder %s13, 2
      // Predicated region
      $region33: #{_mlp_forward_impl.5} parent=5 // pred_check
        %p212 = pneg %p211
      $region34: #{_mlp_forward_impl.5} parent=5 // pred_check_branch
        %214 = sbr.rel (%p212) target = $region36
      $region35: #{_mlp_forward_impl.5} parent=5 // pred_region
        // Predicated region
        $region37: #{_mlp_forward_impl.5} parent=35 // pred_check
          %p215 = pneg %p33
        $region38: #{_mlp_forward_impl.5} parent=35 // pred_check_branch
          %217 = sbr.rel (%p215) target = $region40
        $region39: #{_mlp_forward_impl.5} parent=35 // pred_region
          %s218 = smul.u32 2, %s13
          %p219 = scmp.lt.s32.totalorder %s218, 3
          %s220 = scalar_select %p219, %s218, 3
          %s221 = smul.addr %s220, 4
          %s222 = scalar_lea.vmem %s0, %s221
          %s223 = smul.u32 2, %s13
        $region40: #{_mlp_forward_impl.5} parent=35 // pred_fallthru
          _
      $region36: #{_mlp_forward_impl.5} parent=5 // pred_fallthru
        _
      %p224 = scmp.le.s32.totalorder 1, %s13
      %p225 = scmp.lt.s32.totalorder %s13, 3
      %p226 = pnand %p224, %p225
      %p227 = pneg %p226
      // Predicated region
      $region41: #{_mlp_forward_impl.5} parent=5 // pred_check
        _
      $region42: #{_mlp_forward_impl.5} parent=5 // pred_check_branch
        %229 = sbr.rel (%p226) target = $region44
      $region43: #{_mlp_forward_impl.5} parent=5 // pred_region
        %s230 = ssub.s32 %s13, 1
        // Predicated region
        $region45: #{_mlp_forward_impl.5} parent=43 // pred_check
          %p231 = pneg %p123
        $region46: #{_mlp_forward_impl.5} parent=43 // pred_check_branch
          %233 = sbr.rel (%p231) target = $region48
        $region47: #{_mlp_forward_impl.5} parent=43 // pred_region
          %235 = dma.done [#allocation3], 1024
        $region48: #{_mlp_forward_impl.5} parent=43 // pred_fallthru
          _
        %s236 = smul.u32 2, %s18
        %p237 = scmp.lt.s32.totalorder %s236, 3
        %s238 = scalar_select %p237, %s236, 3
        %s239 = smul.addr %s238, 4
        %s240 = scalar_lea.vmem %s0, %s239
        %p241 = pneg %p39
        %p242 = pneg %p36
        %p243 = pneg %p60
        %p244 = pneg %p57
        %p245 = pneg %p81
        %p246 = pneg %p78
        %p247 = pneg %p102
        %p248 = pneg %p99
        %p249 = pneg %p123
        %p250 = pneg %p120
        %p251 = pneg %p144
        %p252 = pneg %p141
        %p253 = pneg %p170
        %p254 = pneg %p167
        %s255 = smul.u32 2, %s18
        %p256 = scmp.lt.s32.totalorder %s255, 3
        %s257 = scalar_select %p256, %s255, 3
        %s258 = smul.addr %s257, 8
        %s259 = scalar_lea.vmem %s6, %s258
        %s260 = smul.u32 2, %s18
        %p261 = scmp.lt.s32.totalorder %s260, 3
        %s262 = scalar_select %p261, %s260, 3
        %s263 = smul.addr %s262, 4
        %s264 = scalar_lea.vmem %s0, %s263
        %s265 = smul.u32 2, %s18
        %s266 = smul.u32 2, %s18
        %p267 = scmp.lt.s32.totalorder %s266, 3
        %s268 = scalar_select %p267, %s266, 3
        %s269 = smul.addr %s268, 8
        %s270 = scalar_lea.vmem %s6, %s269
        %s271 = smul.u32 2, %s18
        %v272 = vld [vmem:[%s264] sm:$0xf]
        %v273 = vld [vmem:[%s264 + $0x4] sm:$0xf]
        %v274 = vunpack.c.l.bf16 %v272
        %v275 = vunpack.c.l.bf16 %v273
        %v276 = vld [vmem:[%s1] sm:$0x3]
        %v277 = vld [vmem:[%s1 + $0x2] sm:$0x3]
        %vm278 = vcmask 1041408
        %v279 = vsel %vm278, %v276, 0.0
        %v280 = vsel %vm278, %v277, 0.0
        %v281 = vadd.f32 %v279, %v280
        %v282 = vmul.f32 %v281, 0.05
        %v283 = vmul.f32 %v282, %v282
        %v285 = vrot.slane %v283, 7
        %v287 = vsub.f32 %v282, %v285
        %v288 = vmax.f32 %v287, 0.0
        %v289 = vld [vmem:[%s2] sm:$0x1]
        %v290 = vadd.f32 %v288, 1e-05
        %v291 = vrsqrt.pop %v290
        %v292 = vmul.f32 %v291, %v290
        %v293 = vmul.f32 %v292, %v291
        %v294 = vmul.f32 0.5, %v293
        %v295 = vsub.f32 1.5, %v294
        %v296 = vmul.f32 %v291, %v295
        %vm297 = vweird.f32 %v290
        %vm298 = vweird.f32 %v291
        %vm299 = vmor %vm297, %vm298
        %v300 = vsel %vm299, %v291, %v296
        %302 = vst [vmem:[#allocation1] sm:$0xff] %v300
        %s303 = scalar_lea.vmem [#allocation1], 1
        %v304 = vld [vmem:[%s303] ss:$9 sm:$0xff]
        %v306 = vmul.f32 %v289, %v304
        %v307 = vld [vmem:[%s3] sm:$0x1]
        %v308 = vmul.f32 %v282, %v306
        %v309 = vsub.f32 %v307, %v308
        %v311 = vperm.slane %v306, 0
        %v313 = vmul.f32 %v274, %v311
        %v314 = vmul.f32 %v275, %v311
        %v316 = vperm.slane %v309, 0
        %v318 = vadd.f32 %v313, %v316
        %v319 = vadd.f32 %v314, %v316
        %v320 = vmax.f32 %v318, 0.0
        %v321 = vmax.f32 %v319, 0.0
        %v322 = vpack.c.bf16 %v321, %v320
        %v323 = vld [vmem:[#allocation2] sm:$0xf]
        %v324 = vld [vmem:[#allocation2 + $0x4] sm:$0xf]
        %v325 = vld [vmem:[#allocation2 + $0x8] sm:$0xf]
        %v326 = vld [vmem:[#allocation2 + $0xc] sm:$0xf]
        %v327 = vld [vmem:[#allocation2 + $0x10] sm:$0xf]
        %v328 = vld [vmem:[#allocation2 + $0x14] sm:$0xf]
        %v329 = vld [vmem:[#allocation2 + $0x18] sm:$0xf]
        %v330 = vld [vmem:[#allocation2 + $0x1c] sm:$0xf]
        %v331 = vld [vmem:[#allocation2 + $0x20] sm:$0xf]
        %v332 = vld [vmem:[#allocation2 + $0x24] sm:$0xf]
        %v333 = vld [vmem:[#allocation2 + $0x28] sm:$0xf]
        %v334 = vld [vmem:[#allocation2 + $0x2c] sm:$0xf]
        %v335 = vld [vmem:[#allocation2 + $0x30] sm:$0xf]
        %v336 = vld [vmem:[#allocation2 + $0x34] sm:$0xf]
        %v337 = vld [vmem:[#allocation2 + $0x38] sm:$0xf]
        %v338 = vld [vmem:[#allocation2 + $0x3c] sm:$0xf]
        %v339 = vld [vmem:[%s5] sm:$0x1]
        %v341 = vperm.slane %v339, 0
        %v359 = vunpack.c.l.b16 %v323
        %v360 = vunpack.c.l.b16 %v324
        %v361 = vunpack.c.l.b16 %v325
        %v362 = vunpack.c.l.b16 %v326
        %v363 = vunpack.c.l.b16 %v327
        %v364 = vunpack.c.l.b16 %v328
        %v365 = vunpack.c.l.b16 %v329
        %v366 = vunpack.c.l.b16 %v330
        %v367 = vunpack.c.l.b16 %v331
        %v368 = vunpack.c.l.b16 %v332
        %v369 = vunpack.c.l.b16 %v333
        %v370 = vunpack.c.l.b16 %v334
        %v371 = vunpack.c.l.b16 %v335
        %v372 = vunpack.c.l.b16 %v336
        %v373 = vunpack.c.l.b16 %v337
        %v374 = vunpack.c.l.b16 %v338
        %v375 = vpack.c.b16 %v360, %v359
        %v376 = vpack.c.b16 %v362, %v361
        %v377 = vpack.c.b16 %v364, %v363
        %v378 = vpack.c.b16 %v366, %v365
        %v379 = vpack.c.b16 %v368, %v367
        %v380 = vpack.c.b16 %v370, %v369
        %v381 = vpack.c.b16 %v372, %v371
        %v382 = vpack.c.b16 %v374, %v373
        %391 = vmatpush.bf16.msra.mxu0 %v382
        %392 = vmatpush.bf16.msra.mxu0 %v381
        %393 = vmatpush.bf16.msra.mxu0 %v380
        %394 = vmatpush.bf16.msra.mxu0 %v379
        %395 = vmatpush.bf16.msra.mxu0 %v378
        %396 = vmatpush.bf16.msra.mxu0 %v377
        %397 = vmatpush.bf16.msra.mxu0 %v376
        %398 = vmatpush.bf16.msra.mxu0 %v375
        %399 = vmatmul.bf16.gmra.mxu0 %v322
        %v400 = vpop.f32.mrf.mxu0
        %v401 = vadd.f32 %v341, %v400
        %v402 = vpop.f32.mrf.mxu0
        %v403 = vadd.f32 %v341, %v402
        %404 = vdwg.mxu0
        %405 = vst [vmem:[%s270] sm:$0xff] %v401
        %406 = vst [vmem:[%s270 + $0x8] sm:$0xff] %v403
        %s407 = smul.u32 2, %s18
        %p408 = scmp.lt.s32.totalorder %s407, 3
        %s409 = scalar_select %p408, %s407, 3
        %s410 = smul.addr %s409, 8
        %s411 = scalar_lea.vmem %s6, %s410
        // Predicated region
        $region49: #{_mlp_forward_impl.5} parent=43 // pred_check
          %p412 = pneg %p167
        $region50: #{_mlp_forward_impl.5} parent=43 // pred_check_branch
          %414 = sbr.rel (%p412) target = $region52
        $region51: #{_mlp_forward_impl.5} parent=43 // pred_region
          %s415 = smul.u32 2, %s18
        $region52: #{_mlp_forward_impl.5} parent=43 // pred_fallthru
          _
      $region44: #{_mlp_forward_impl.5} parent=5 // pred_fallthru
        _
      %p416 = scmp.le.s32.totalorder 2, %s13
      // Predicated region
      $region53: #{_mlp_forward_impl.5} parent=5 // pred_check
        %p417 = pneg %p416
      $region54: #{_mlp_forward_impl.5} parent=5 // pred_check_branch
        %419 = sbr.rel (%p417) target = $region56
      $region55: #{_mlp_forward_impl.5} parent=5 // pred_region
        %s420 = ssub.s32 %s13, 2
        // Predicated region
        $region57: #{_mlp_forward_impl.5} parent=55 // pred_check
          %p421 = pneg %p173
        $region58: #{_mlp_forward_impl.5} parent=55 // pred_check_branch
          %423 = sbr.rel (%p421) target = $region60
        $region59: #{_mlp_forward_impl.5} parent=55 // pred_region
          %s424 = smul.u32 2, %s19
          %p425 = scmp.lt.s32.totalorder %s424, 3
          %s426 = scalar_select %p425, %s424, 3
          %s427 = smul.addr %s426, 8
          %s428 = scalar_lea.vmem %s6, %s427
        $region60: #{_mlp_forward_impl.5} parent=55 // pred_fallthru
          _
      $region56: #{_mlp_forward_impl.5} parent=5 // pred_fallthru
        _
    $region6: #{_mlp_forward_impl.5} parent=1 // loop_footer
      %s17 = sadd.s32 1, %s13
    $region7: #{_mlp_forward_impl.5} parent=1 // loop_footer_branch
      %12 = sbr.rel target = $region3
    $region8: #{_mlp_forward_impl.5} parent=1 // loop_exit
      _
    %429 = vsyncpa [#allocation3], 1
    %s430 = scalar_lea.sflag [#allocation3], 1
    %431 = vsyncpa %s430, 1

// kernel: _mlp_forward_impl.4
$region0: #{_mlp_forward_impl.4}
  #allocation0 [shape = 'u32[]', space=smem, size = 0x4, offset = 0x4, fixed_abs, tag = 'smem constant byte address 0x4 - core index']
  #allocation1 [shape = 'u32[72,128]{1,0:T(1,128)}', space=vmem, size = 0x9000, scoped, tag = 'internal scratch']
  %s0 = inlined_call_operand.vmem [shape: bf16[32,128], index: 0, kind: input, shape index: {}]
  %s1 = inlined_call_operand.vmem [shape: f32[2,2,128], index: 1, kind: input, shape index: {}]
  %s2 = inlined_call_operand.vmem [shape: f32[1,128], index: 2, kind: input, shape index: {}]
  %s3 = inlined_call_operand.vmem [shape: f32[1,128], index: 3, kind: input, shape index: {}]
  %s4 = inlined_call_operand.hbm [shape: bf16[128,128], index: 4, kind: input, shape index: {}]
  %s5 = inlined_call_operand.vmem [shape: bf16[32,128], index: 5, kind: output, shape index: {0}]
  %s6 = inlined_call_operand.vmem [shape: f32[2,2,128], index: 6, kind: output, shape index: {1}]
  %7 = xla_tuple %s5, %s6
  %s8 = sld [smem:[#allocation0]]
  $region73: #{_mlp_forward_impl.4} parent=0
    _
  %s10 = ssub.s32 1, %s8
  %s11 = scalar_select 0, %s10, %s8
  $region1: #{_mlp_forward_impl.4} parent=0
    #allocation2 [shape = 'u8[32768]{0}', space=vmem, size = 0x8000, scoped, tag = 'input window, operand 4, single buffered']
    #allocation3 [shape = 's32[2]{0}', space=sflag, size = 0x8, scoped, tag = 'scoped memory for _mlp_forward_impl.4']
    %12 = vsyncpa [#allocation3], 0
    loop: start=0, step=1, limit=4
    $region2: #{_mlp_forward_impl.4} parent=1 // loop_pre_header
      _
    $region3: #{_mlp_forward_impl.4} parent=1 // loop_header
      %s14 = sphi 0, %s18
      %p15 = scmp.ge.s32.totalorder %s14, 4
      %s24 = sphi 0, %s26
      %s27 = sphi 0, %s24
      %s28 = sphi 0, %s27
      %s44 = sphi 0, %s28
      %s48 = sphi 0, %s48
      %s50 = sphi 0, %s48
      %s51 = sphi 0, %s50
      %s65 = sphi 0, %s51
      %s69 = sphi 0, %s69
      %s71 = sphi 0, %s69
      %s72 = sphi 0, %s71
      %s86 = sphi 0, %s72
      %s90 = sphi 0, %s90
      %s92 = sphi 0, %s90
      %s93 = sphi 0, %s92
      %s107 = sphi 0, %s93
      %s111 = sphi 0, %s111
      %s113 = sphi 0, %s111
      %s114 = sphi 0, %s113
      %s128 = sphi 0, %s114
      %s134 = sphi 0, %s136
      %s137 = sphi 0, %s134
      %s138 = sphi 0, %s137
      %s154 = sphi 0, %s138
      %s160 = sphi 0, %s162
      %s163 = sphi 0, %s160
      %s164 = sphi 0, %s163
      %s180 = sphi 0, %s164
    $region4: #{_mlp_forward_impl.4} parent=1 // loop_header_branch
      %17 = sbr.rel (%p15) target = $region8
    $region5: #{_mlp_forward_impl.4} parent=1 // loop_body
      %s19 = ssub.s32 %s14, 1
      %s20 = ssub.s32 %s14, 2
      %s21 = sadd.s32 %s14, 1
      %s22 = ssub.s32 %s14, %s21
      %p23 = scmp.eq.s32.totalorder %s22, 0
      %s25 = sadd.s32 %s24, 1
      %s26 = scalar_select %p23, %s24, %s25
      %p29 = pneg %p23
      %p30 = scmp.eq.s32.totalorder %s14, 1
      %p31 = por %p29, %p30
      %p32 = scmp.ne.s32.totalorder %s24, %s27
      %p33 = scmp.eq.s32.totalorder %s14, 0
      %p34 = por %p32, %p33
      %p35 = scmp.ne.s32.totalorder %s24, %s27
      %p36 = scmp.eq.s32.totalorder %s19, 1
      %p37 = por %p35, %p36
      %p38 = scmp.ne.s32.totalorder %s27, %s28
      %p39 = scmp.eq.s32.totalorder %s19, 0
      %p40 = por %p38, %p39
      %p41 = scmp.ne.s32.totalorder %s27, %s28
      %p42 = scmp.eq.s32.totalorder %s20, 1
      %p43 = por %p41, %p42
      %p45 = scmp.ne.s32.totalorder %s28, %s44
      %p46 = scmp.eq.s32.totalorder %s20, 0
      %p47 = por %p45, %p46
      %s49 = sadd.s32 %s48, 1
      %p52 = scmp.eq.s32.totalorder %s14, 1
      %p53 = scmp.ne.s32.totalorder %s48, %s50
      %p54 = scmp.eq.s32.totalorder %s14, 0
      %p55 = por %p53, %p54
      %p56 = scmp.ne.s32.totalorder %s48, %s50
      %p57 = scmp.eq.s32.totalorder %s19, 1
      %p58 = por %p56, %p57
      %p59 = scmp.ne.s32.totalorder %s50, %s51
      %p60 = scmp.eq.s32.totalorder %s19, 0
      %p61 = por %p59, %p60
      %p62 = scmp.ne.s32.totalorder %s50, %s51
      %p63 = scmp.eq.s32.totalorder %s20, 1
      %p64 = por %p62, %p63
      %p66 = scmp.ne.s32.totalorder %s51, %s65
      %p67 = scmp.eq.s32.totalorder %s20, 0
      %p68 = por %p66, %p67
      %s70 = sadd.s32 %s69, 1
      %p73 = scmp.eq.s32.totalorder %s14, 1
      %p74 = scmp.ne.s32.totalorder %s69, %s71
      %p75 = scmp.eq.s32.totalorder %s14, 0
      %p76 = por %p74, %p75
      %p77 = scmp.ne.s32.totalorder %s69, %s71
      %p78 = scmp.eq.s32.totalorder %s19, 1
      %p79 = por %p77, %p78
      %p80 = scmp.ne.s32.totalorder %s71, %s72
      %p81 = scmp.eq.s32.totalorder %s19, 0
      %p82 = por %p80, %p81
      %p83 = scmp.ne.s32.totalorder %s71, %s72
      %p84 = scmp.eq.s32.totalorder %s20, 1
      %p85 = por %p83, %p84
      %p87 = scmp.ne.s32.totalorder %s72, %s86
      %p88 = scmp.eq.s32.totalorder %s20, 0
      %p89 = por %p87, %p88
      %s91 = sadd.s32 %s90, 1
      %p94 = scmp.eq.s32.totalorder %s14, 1
      %p95 = scmp.ne.s32.totalorder %s90, %s92
      %p96 = scmp.eq.s32.totalorder %s14, 0
      %p97 = por %p95, %p96
      %p98 = scmp.ne.s32.totalorder %s90, %s92
      %p99 = scmp.eq.s32.totalorder %s19, 1
      %p100 = por %p98, %p99
      %p101 = scmp.ne.s32.totalorder %s92, %s93
      %p102 = scmp.eq.s32.totalorder %s19, 0
      %p103 = por %p101, %p102
      %p104 = scmp.ne.s32.totalorder %s92, %s93
      %p105 = scmp.eq.s32.totalorder %s20, 1
      %p106 = por %p104, %p105
      %p108 = scmp.ne.s32.totalorder %s93, %s107
      %p109 = scmp.eq.s32.totalorder %s20, 0
      %p110 = por %p108, %p109
      %s112 = sadd.s32 %s111, 1
      %p115 = scmp.eq.s32.totalorder %s14, 1
      %p116 = scmp.ne.s32.totalorder %s111, %s113
      %p117 = scmp.eq.s32.totalorder %s14, 0
      %p118 = por %p116, %p117
      %p119 = scmp.ne.s32.totalorder %s111, %s113
      %p120 = scmp.eq.s32.totalorder %s19, 1
      %p121 = por %p119, %p120
      %p122 = scmp.ne.s32.totalorder %s113, %s114
      %p123 = scmp.eq.s32.totalorder %s19, 0
      %p124 = por %p122, %p123
      %p125 = scmp.ne.s32.totalorder %s113, %s114
      %p126 = scmp.eq.s32.totalorder %s20, 1
      %p127 = por %p125, %p126
      %p129 = scmp.ne.s32.totalorder %s114, %s128
      %p130 = scmp.eq.s32.totalorder %s20, 0
      %p131 = por %p129, %p130
      %s132 = ssub.s32 %s14, %s21
      %p133 = scmp.eq.s32.totalorder %s132, 0
      %s135 = sadd.s32 %s134, 1
      %s136 = scalar_select %p133, %s134, %s135
      %p139 = pneg %p133
      %p140 = scmp.eq.s32.totalorder %s14, 1
      %p141 = por %p139, %p140
      %p142 = scmp.ne.s32.totalorder %s134, %s137
      %p143 = scmp.eq.s32.totalorder %s14, 0
      %p144 = por %p142, %p143
      %p145 = scmp.ne.s32.totalorder %s134, %s137
      %p146 = scmp.eq.s32.totalorder %s19, 1
      %p147 = por %p145, %p146
      %p148 = scmp.ne.s32.totalorder %s137, %s138
      %p149 = scmp.eq.s32.totalorder %s19, 0
      %p150 = por %p148, %p149
      %p151 = scmp.ne.s32.totalorder %s137, %s138
      %p152 = scmp.eq.s32.totalorder %s20, 1
      %p153 = por %p151, %p152
      %p155 = scmp.ne.s32.totalorder %s138, %s154
      %p156 = scmp.eq.s32.totalorder %s20, 0
      %p157 = por %p155, %p156
      %s158 = ssub.s32 %s14, %s21
      %p159 = scmp.eq.s32.totalorder %s158, 0
      %s161 = sadd.s32 %s160, 1
      %s162 = scalar_select %p159, %s160, %s161
      %p165 = pneg %p159
      %p166 = scmp.eq.s32.totalorder %s14, 1
      %p167 = por %p165, %p166
      %p168 = scmp.ne.s32.totalorder %s160, %s163
      %p169 = scmp.eq.s32.totalorder %s14, 0
      %p170 = por %p168, %p169
      %p171 = scmp.ne.s32.totalorder %s160, %s163
      %p172 = scmp.eq.s32.totalorder %s19, 1
      %p173 = por %p171, %p172
      %p174 = scmp.ne.s32.totalorder %s163, %s164
      %p175 = scmp.eq.s32.totalorder %s19, 0
      %p176 = por %p174, %p175
      %p177 = scmp.ne.s32.totalorder %s163, %s164
      %p178 = scmp.eq.s32.totalorder %s20, 1
      %p179 = por %p177, %p178
      %p181 = scmp.ne.s32.totalorder %s164, %s180
      %p182 = scmp.eq.s32.totalorder %s20, 0
      %p183 = por %p181, %p182
      %p184 = scmp.le.s32.totalorder 1, %s14
      %p185 = scmp.lt.s32.totalorder %s14, 3
      %p186 = pnand %p184, %p185
      %p187 = pneg %p186
      // Predicated region
      $region9: #{_mlp_forward_impl.4} parent=5 // pred_check
        _
      $region10: #{_mlp_forward_impl.4} parent=5 // pred_check_branch
        %189 = sbr.rel (%p186) target = $region12
      $region11: #{_mlp_forward_impl.4} parent=5 // pred_region
        %s190 = ssub.s32 %s14, 1
        // Predicated region
        $region13: #{_mlp_forward_impl.4} parent=11 // pred_check
          %p191 = pneg %p61
        $region14: #{_mlp_forward_impl.4} parent=11 // pred_check_branch
          %193 = sbr.rel (%p191) target = $region16
        $region15: #{_mlp_forward_impl.4} parent=11 // pred_region
          _
        $region16: #{_mlp_forward_impl.4} parent=11 // pred_fallthru
          _
        // Predicated region
        $region17: #{_mlp_forward_impl.4} parent=11 // pred_check
          %p194 = pneg %p82
        $region18: #{_mlp_forward_impl.4} parent=11 // pred_check_branch
          %196 = sbr.rel (%p194) target = $region20
        $region19: #{_mlp_forward_impl.4} parent=11 // pred_region
          _
        $region20: #{_mlp_forward_impl.4} parent=11 // pred_fallthru
          _
        // Predicated region
        $region21: #{_mlp_forward_impl.4} parent=11 // pred_check
          %p197 = pneg %p103
        $region22: #{_mlp_forward_impl.4} parent=11 // pred_check_branch
          %199 = sbr.rel (%p197) target = $region24
        $region23: #{_mlp_forward_impl.4} parent=11 // pred_region
          _
        $region24: #{_mlp_forward_impl.4} parent=11 // pred_fallthru
          _
        // Predicated region
        $region25: #{_mlp_forward_impl.4} parent=11 // pred_check
          %p200 = pneg %p124
        $region26: #{_mlp_forward_impl.4} parent=11 // pred_check_branch
          %202 = sbr.rel (%p200) target = $region28
        $region27: #{_mlp_forward_impl.4} parent=11 // pred_region
          %204 = vsyncadd [#allocation3], 0
          %s205 = sshll.u32 %s4, 4
          %s206 = int_to_ptr.hbm [resolvable:$true] %s205
          %s207 = sshll.u32 [#allocation2], 4
          %s208 = int_to_ptr.vmem [resolvable:$true] %s207
          %213 = dma.hbm_to_vmem [thread:$0]  %s206, 1024, %s208, [#allocation3], 64, 64, 4
        $region28: #{_mlp_forward_impl.4} parent=11 // pred_fallthru
          _
      $region12: #{_mlp_forward_impl.4} parent=5 // pred_fallthru
        _
      %p214 = scmp.lt.s32.totalorder %s14, 2
      // Predicated region
      $region29: #{_mlp_forward_impl.4} parent=5 // pred_check
        %p215 = pneg %p214
      $region30: #{_mlp_forward_impl.4} parent=5 // pred_check_branch
        %217 = sbr.rel (%p215) target = $region32
      $region31: #{_mlp_forward_impl.4} parent=5 // pred_region
        // Predicated region
        $region33: #{_mlp_forward_impl.4} parent=31 // pred_check
          %p218 = pneg %p34
        $region34: #{_mlp_forward_impl.4} parent=31 // pred_check_branch
          %220 = sbr.rel (%p218) target = $region36
        $region35: #{_mlp_forward_impl.4} parent=31 // pred_region
          %s221 = smul.u32 2, %s14
          %p222 = scmp.lt.s32.totalorder %s221, 3
          %s223 = scalar_select %p222, %s221, 3
          %s224 = smul.addr %s223, 4
          %s225 = scalar_lea.vmem %s0, %s224
          %s226 = smul.u32 2, %s14
        $region36: #{_mlp_forward_impl.4} parent=31 // pred_fallthru
          _
      $region32: #{_mlp_forward_impl.4} parent=5 // pred_fallthru
        _
      %p227 = scmp.le.s32.totalorder 1, %s14
      %p228 = scmp.lt.s32.totalorder %s14, 3
      %p229 = pnand %p227, %p228
      %p230 = pneg %p229
      // Predicated region
      $region37: #{_mlp_forward_impl.4} parent=5 // pred_check
        _
      $region38: #{_mlp_forward_impl.4} parent=5 // pred_check_branch
        %232 = sbr.rel (%p229) target = $region40
      $region39: #{_mlp_forward_impl.4} parent=5 // pred_region
        %s233 = ssub.s32 %s14, 1
        // Predicated region
        $region41: #{_mlp_forward_impl.4} parent=39 // pred_check
          %p234 = pneg %p124
        $region42: #{_mlp_forward_impl.4} parent=39 // pred_check_branch
          %236 = sbr.rel (%p234) target = $region44
        $region43: #{_mlp_forward_impl.4} parent=39 // pred_region
          %238 = dma.done [#allocation3], 1024
        $region44: #{_mlp_forward_impl.4} parent=39 // pred_fallthru
          _
        %s239 = smul.u32 2, %s19
        %p240 = scmp.lt.s32.totalorder %s239, 3
        %s241 = scalar_select %p240, %s239, 3
        %s242 = smul.addr %s241, 4
        %s243 = scalar_lea.vmem %s0, %s242
        %p244 = pneg %p40
        %p245 = pneg %p37
        %p246 = pneg %p61
        %p247 = pneg %p58
        %p248 = pneg %p82
        %p249 = pneg %p79
        %p250 = pneg %p103
        %p251 = pneg %p100
        %p252 = pneg %p124
        %p253 = pneg %p121
        %p254 = pneg %p150
        %p255 = pneg %p147
        %s256 = smul.u32 2, %s19
        %p257 = scmp.lt.s32.totalorder %s256, 3
        %s258 = scalar_select %p257, %s256, 3
        %s259 = smul.addr %s258, 4
        %s260 = scalar_lea.vmem %s5, %s259
        %p261 = pneg %p176
        %p262 = pneg %p173
        %p263 = scmp.lt.s32.totalorder %s19, 1
        %s264 = scalar_select %p263, %s19, 1
        %s265 = smul.addr %s264, 2
        %s266 = scalar_lea.vmem %s6, %s265
        %s267 = smul.u32 2, %s19
        %p268 = scmp.lt.s32.totalorder %s267, 3
        %s269 = scalar_select %p268, %s267, 3
        %s270 = smul.addr %s269, 4
        %s271 = scalar_lea.vmem %s0, %s270
        %s272 = smul.u32 2, %s19
        %s273 = smul.u32 2, %s19
        %p274 = scmp.lt.s32.totalorder %s273, 3
        %s275 = scalar_select %p274, %s273, 3
        %s276 = smul.addr %s275, 4
        %s277 = scalar_lea.vmem %s5, %s276
        %s278 = smul.u32 2, %s19
        %p279 = scmp.lt.s32.totalorder %s19, 1
        %s280 = scalar_select %p279, %s19, 1
        %s281 = smul.addr %s280, 2
        %s282 = scalar_lea.vmem %s6, %s281
        %v283 = vld [vmem:[%s271] sm:$0xf]
        %v284 = vld [vmem:[%s271 + $0x4] sm:$0xf]
        %v285 = vunpack.c.l.bf16 %v283
        %v286 = vunpack.c.l.bf16 %v284
        %v287 = vld [vmem:[%s1] sm:$0x3]
        %v288 = vld [vmem:[%s1 + $0x2] sm:$0x3]
        %vm289 = vcmask 1041408
        %v290 = vsel %vm289, %v287, 0.0
        %v291 = vsel %vm289, %v288, 0.0
        %v292 = vadd.f32 %v290, %v291
        %v293 = vmul.f32 %v292, 0.05
        %v294 = vmul.f32 %v293, %v293
        %v296 = vrot.slane %v294, 7
        %v298 = vsub.f32 %v293, %v296
        %v299 = vmax.f32 %v298, 0.0
        %v300 = vld [vmem:[%s2] sm:$0x1]
        %v301 = vadd.f32 %v299, 1e-05
        %v302 = vrsqrt.pop %v301
        %v303 = vmul.f32 %v302, %v301
        %v304 = vmul.f32 %v303, %v302
        %v305 = vmul.f32 0.5, %v304
        %v306 = vsub.f32 1.5, %v305
        %v307 = vmul.f32 %v302, %v306
        %vm308 = vweird.f32 %v301
        %vm309 = vweird.f32 %v302
        %vm310 = vmor %vm308, %vm309
        %v311 = vsel %vm310, %v302, %v307
        %313 = vst [vmem:[#allocation1] sm:$0xff] %v311
        %s314 = scalar_lea.vmem [#allocation1], 1
        %v315 = vld [vmem:[%s314] ss:$9 sm:$0xff]
        %v317 = vmul.f32 %v300, %v315
        %v318 = vld [vmem:[%s3] sm:$0x1]
        %v319 = vmul.f32 %v293, %v317
        %v320 = vsub.f32 %v318, %v319
        %v322 = vperm.slane %v317, 0
        %v324 = vmul.f32 %v285, %v322
        %v325 = vmul.f32 %v286, %v322
        %v327 = vperm.slane %v320, 0
        %v329 = vadd.f32 %v324, %v327
        %v330 = vadd.f32 %v325, %v327
        %v331 = vmax.f32 %v329, 0.0
        %v332 = vmax.f32 %v330, 0.0
        %v333 = vpack.c.bf16 %v332, %v331
        %v334 = vld [vmem:[#allocation2] sm:$0xf]
        %v335 = vld [vmem:[#allocation2 + $0x4] sm:$0xf]
        %v336 = vld [vmem:[#allocation2 + $0x8] sm:$0xf]
        %v337 = vld [vmem:[#allocation2 + $0xc] sm:$0xf]
        %v338 = vld [vmem:[#allocation2 + $0x10] sm:$0xf]
        %v339 = vld [vmem:[#allocation2 + $0x14] sm:$0xf]
        %v340 = vld [vmem:[#allocation2 + $0x18] sm:$0xf]
        %v341 = vld [vmem:[#allocation2 + $0x1c] sm:$0xf]
        %v342 = vld [vmem:[#allocation2 + $0x20] sm:$0xf]
        %v343 = vld [vmem:[#allocation2 + $0x24] sm:$0xf]
        %v344 = vld [vmem:[#allocation2 + $0x28] sm:$0xf]
        %v345 = vld [vmem:[#allocation2 + $0x2c] sm:$0xf]
        %v346 = vld [vmem:[#allocation2 + $0x30] sm:$0xf]
        %v347 = vld [vmem:[#allocation2 + $0x34] sm:$0xf]
        %v348 = vld [vmem:[#allocation2 + $0x38] sm:$0xf]
        %v349 = vld [vmem:[#allocation2 + $0x3c] sm:$0xf]
        %v366 = vunpack.c.l.b16 %v334
        %v367 = vunpack.c.l.b16 %v335
        %v368 = vunpack.c.l.b16 %v336
        %v369 = vunpack.c.l.b16 %v337
        %v370 = vunpack.c.l.b16 %v338
        %v371 = vunpack.c.l.b16 %v339
        %v372 = vunpack.c.l.b16 %v340
        %v373 = vunpack.c.l.b16 %v341
        %v374 = vunpack.c.l.b16 %v342
        %v375 = vunpack.c.l.b16 %v343
        %v376 = vunpack.c.l.b16 %v344
        %v377 = vunpack.c.l.b16 %v345
        %v378 = vunpack.c.l.b16 %v346
        %v379 = vunpack.c.l.b16 %v347
        %v380 = vunpack.c.l.b16 %v348
        %v381 = vunpack.c.l.b16 %v349
        %v382 = vpack.c.b16 %v367, %v366
        %v383 = vpack.c.b16 %v369, %v368
        %v384 = vpack.c.b16 %v371, %v370
        %v385 = vpack.c.b16 %v373, %v372
        %v386 = vpack.c.b16 %v375, %v374
        %v387 = vpack.c.b16 %v377, %v376
        %v388 = vpack.c.b16 %v379, %v378
        %v389 = vpack.c.b16 %v381, %v380
        %398 = vmatpush.bf16.msra.mxu0 %v389
        %399 = vmatpush.bf16.msra.mxu0 %v388
        %400 = vmatpush.bf16.msra.mxu0 %v387
        %401 = vmatpush.bf16.msra.mxu0 %v386
        %402 = vmatpush.bf16.msra.mxu0 %v385
        %403 = vmatpush.bf16.msra.mxu0 %v384
        %404 = vmatpush.bf16.msra.mxu0 %v383
        %405 = vmatpush.bf16.msra.mxu0 %v382
        %406 = vmatmul.bf16.gmra.mxu0 %v333
        %v407 = vpop.f32.mrf.mxu0
        %v408 = vadd.f32 0.0, %v407
        %v409 = vpop.f32.mrf.mxu0
        %v410 = vadd.f32 0.0, %v409
        %411 = vdwg.mxu0
        %v412 = vpack.c.bf16 %v408, %v408
        %v413 = vpack.c.bf16 %v410, %v410
        %414 = vst [vmem:[%s277] sm:$0xf] %v412
        %415 = vst [vmem:[%s277 + $0x4] sm:$0xf] %v413
        %s416 = sadd.s32 %s19, 1
        %s417 = smul.u32 %s416, 16
        %p418 = scmp.gt.s32.totalorder %s417, 20
        // Predicated region
        $region45: #{_mlp_forward_impl.4} parent=39 // pred_check
          %p419 = pneg %p418
        $region46: #{_mlp_forward_impl.4} parent=39 // pred_check_branch
          %421 = sbr.rel (%p419) target = $region48
        $region47: #{_mlp_forward_impl.4} parent=39 // pred_region
          %v422 = vlaneseq
          %v423 = vshrl.u32 %v422, 7
          %v424 = vadd.s32 %v423, 8
          %s425 = smul.u32 %s19, 16
          %v426 = vstv %s425
          %v427 = vadd.s32 %v423, %v426
          %v428 = vadd.s32 %v424, %v426
          %vm429 = vcmp.lt.s32.totalorder %v427, 20
          %vm430 = vcmp.lt.s32.totalorder %v428, 20
          %v431 = vsel %vm429, 1, 0
          %v432 = vsel %vm430, 1, 0
          %vm433 = vcmp.eq.s32.totalorder %v431, 1
          %vm434 = vcmp.eq.s32.totalorder %v432, 1
          %v435 = vsel %vm433, %v408, 0.0
          %v436 = vsel %vm434, %v410, 0.0
          %v437 = vadd.f32 %v435, %v436
          %v438 = vrot.slane %v437, 4
          %v439 = vadd.f32 %v437, %v438
          %v440 = vrot.slane %v439, 2
          %v441 = vadd.f32 %v439, %v440
          %v442 = vrot.slane %v441, 1
          %v443 = vadd.f32 %v441, %v442
          %v444 = vmul.f32 %v435, %v435
          %v445 = vmul.f32 %v436, %v436
          %v446 = vadd.f32 %v444, %v445
          %v447 = vrot.slane %v446, 4
          %v448 = vadd.f32 %v446, %v447
          %v449 = vrot.slane %v448, 2
          %v450 = vadd.f32 %v448, %v449
          %v451 = vrot.slane %v450, 1
          %v452 = vadd.f32 %v450, %v451
          %vm453 = vcmask 1040384
          %v454 = vsel %vm453, %v443, %v452
          %455 = vst [vmem:[%s282] sm:$0x3] %v454
        $region48: #{_mlp_forward_impl.4} parent=39 // pred_fallthru
          _
        %p456 = scmp.le.s32.totalorder %s417, 20
        // Predicated region
        $region49: #{_mlp_forward_impl.4} parent=39 // pred_check
          %p457 = pneg %p456
        $region50: #{_mlp_forward_impl.4} parent=39 // pred_check_branch
          %459 = sbr.rel (%p457) target = $region52
        $region51: #{_mlp_forward_impl.4} parent=39 // pred_region
          %v460 = vadd.f32 %v408, %v410
          %v461 = vrot.slane %v460, 4
          %v462 = vadd.f32 %v460, %v461
          %v463 = vrot.slane %v462, 2
          %v464 = vadd.f32 %v462, %v463
          %v465 = vrot.slane %v464, 1
          %v466 = vadd.f32 %v464, %v465
          %v467 = vmul.f32 %v408, %v408
          %v468 = vmul.f32 %v410, %v410
          %v469 = vadd.f32 %v467, %v468
          %v470 = vrot.slane %v469, 4
          %v471 = vadd.f32 %v469, %v470
          %v472 = vrot.slane %v471, 2
          %v473 = vadd.f32 %v471, %v472
          %v474 = vrot.slane %v473, 1
          %v475 = vadd.f32 %v473, %v474
          %vm476 = vcmask 1040384
          %v477 = vsel %vm476, %v466, %v475
          %478 = vst [vmem:[%s282] sm:$0x3] %v477
        $region52: #{_mlp_forward_impl.4} parent=39 // pred_fallthru
          _
        %s479 = smul.u32 2, %s19
        %p480 = scmp.lt.s32.totalorder %s479, 3
        %s481 = scalar_select %p480, %s479, 3
        %s482 = smul.addr %s481, 4
        %s483 = scalar_lea.vmem %s5, %s482
        %p484 = scmp.lt.s32.totalorder %s19, 1
        %s485 = scalar_select %p484, %s19, 1
        %s486 = smul.addr %s485, 2
        %s487 = scalar_lea.vmem %s6, %s486
        // Predicated region
        $region53: #{_mlp_forward_impl.4} parent=39 // pred_check
          %p488 = pneg %p147
        $region54: #{_mlp_forward_impl.4} parent=39 // pred_check_branch
          %490 = sbr.rel (%p488) target = $region56
        $region55: #{_mlp_forward_impl.4} parent=39 // pred_region
          %s491 = smul.u32 2, %s19
        $region56: #{_mlp_forward_impl.4} parent=39 // pred_fallthru
          _
        // Predicated region
        $region57: #{_mlp_forward_impl.4} parent=39 // pred_check
          %p492 = pneg %p173
        $region58: #{_mlp_forward_impl.4} parent=39 // pred_check_branch
          %494 = sbr.rel (%p492) target = $region60
        $region59: #{_mlp_forward_impl.4} parent=39 // pred_region
          _
        $region60: #{_mlp_forward_impl.4} parent=39 // pred_fallthru
          _
      $region40: #{_mlp_forward_impl.4} parent=5 // pred_fallthru
        _
      %p495 = scmp.le.s32.totalorder 2, %s14
      // Predicated region
      $region61: #{_mlp_forward_impl.4} parent=5 // pred_check
        %p496 = pneg %p495
      $region62: #{_mlp_forward_impl.4} parent=5 // pred_check_branch
        %498 = sbr.rel (%p496) target = $region64
      $region63: #{_mlp_forward_impl.4} parent=5 // pred_region
        %s499 = ssub.s32 %s14, 2
        // Predicated region
        $region65: #{_mlp_forward_impl.4} parent=63 // pred_check
          %p500 = pneg %p153
        $region66: #{_mlp_forward_impl.4} parent=63 // pred_check_branch
          %502 = sbr.rel (%p500) target = $region68
        $region67: #{_mlp_forward_impl.4} parent=63 // pred_region
          %s503 = smul.u32 2, %s20
          %p504 = scmp.lt.s32.totalorder %s503, 3
          %s505 = scalar_select %p504, %s503, 3
          %s506 = smul.addr %s505, 4
          %s507 = scalar_lea.vmem %s5, %s506
        $region68: #{_mlp_forward_impl.4} parent=63 // pred_fallthru
          _
        // Predicated region
        $region69: #{_mlp_forward_impl.4} parent=63 // pred_check
          %p508 = pneg %p179
        $region70: #{_mlp_forward_impl.4} parent=63 // pred_check_branch
          %510 = sbr.rel (%p508) target = $region72
        $region71: #{_mlp_forward_impl.4} parent=63 // pred_region
          %p511 = scmp.lt.s32.totalorder %s20, 1
          %s512 = scalar_select %p511, %s20, 1
          %s513 = smul.addr %s512, 2
          %s514 = scalar_lea.vmem %s6, %s513
        $region72: #{_mlp_forward_impl.4} parent=63 // pred_fallthru
          _
      $region64: #{_mlp_forward_impl.4} parent=5 // pred_fallthru
        _
    $region6: #{_mlp_forward_impl.4} parent=1 // loop_footer
      %s18 = sadd.s32 1, %s14
    $region7: #{_mlp_forward_impl.4} parent=1 // loop_footer_branch
      %13 = sbr.rel target = $region3
    $region8: #{_mlp_forward_impl.4} parent=1 // loop_exit
      _
    %515 = vsyncpa [#allocation3], 1
    %s516 = scalar_lea.sflag [#allocation3], 1
    %517 = vsyncpa %s516, 1

</llo_original>
